<compile_context>
chip_gen: v7x
topology: tpu7x:2x2x1
jax: 0.10.0
libtpu: 0.0.40
codegen_flags: <defaults>
</compile_context>

<pallas_src>
import functools

import jax
import jax.numpy as jnp
from jax import lax
from jax.experimental import pallas as pl
from jax.experimental.pallas import tpu as pltpu


# --------------------------------------------------------------------------
# Glue helpers (plain JAX): parameter preprocessing + tiny M x M linear algebra
# --------------------------------------------------------------------------
def vec2tril(vec, m):
    """vec: (..., m*(m+1)//2) -> lower-tri (..., m, m) with softplus diagonal."""
    rows, cols = jnp.tril_indices(m)
    tril = jnp.zeros(vec.shape[:-1] + (m, m), vec.dtype)
    tril = tril.at[..., rows, cols].set(vec)
    eye = jnp.eye(m, dtype=bool)
    return jnp.where(eye, jax.nn.softplus(tril), tril)


def rbf_kernel_mat(sf2, ls, X, Y):
    """RBF kernel: sf2 * exp(-0.5 * ||(x - y)/ls||^2). X: (...,M,D), Y: (...,N,D)."""
    Xs = X / ls
    Ys = Y / ls
    x2 = jnp.sum(Xs * Xs, axis=-1)
    y2 = jnp.sum(Ys * Ys, axis=-1)
    cross = Xs @ jnp.swapaxes(Ys, -1, -2)
    d2 = x2[..., :, None] + y2[..., None, :] - 2.0 * cross
    return sf2 * jnp.exp(-0.5 * d2)


def sample_hypers(key, log_mean, log_logvar, n_hypers):
    """theta = exp(log_mean + eps * exp(0.5*log_logvar)); theta: (n_hypers, D+1)."""
    eps = jax.random.normal(key, (n_hypers, log_mean.shape[-1]), jnp.float32)
    return jnp.exp(log_mean + eps * jnp.exp(0.5 * log_logvar))


def chol_solve(Lmat, Bmat):
    """Solve (L L^T) X = B with L lower-triangular (batched)."""
    y = lax.linalg.triangular_solve(Lmat, Bmat, left_side=True, lower=True)
    return lax.linalg.triangular_solve(Lmat, y, left_side=True, lower=True,
                                       transpose_a=True)


# --------------------------------------------------------------------------
# Pallas kernel: one batch tile per grid step, all hyper samples fused.
#   E      = exp(-0.5 * ||(x - z)/ls||^2)           (Kzx = sf2 * E)
#   f_mean = (sf2*w)         . E                    (w  = Kzz^-1 mu)
#   f_var  = sf2 + E . (sf2^2 * C) E                (C  = Kzz^-1 (S-Kzz) Kzz^-1)
# --------------------------------------------------------------------------
def _vargp_pf_diag_kernel(ils2_ref, xt_ref, zs_ref, z2_ref, wc_ref, sf2_ref,
                          pmu_ref, pvar_ref, *, n_h, out, M, var_floor):
    nb = n_h * out                           # (hyper, output-dim) pairs
    Bt = xt_ref.shape[1]                     # batch tile (multiple of 128)

    xt = xt_ref[...]                         # (D, Bt), batch on lanes
    xsq = xt * xt

    # x2[h, b] = sum_d x[d,b]^2 / ls[h,d]^2  -- single MXU push for all hypers.
    x2 = lax.dot_general(ils2_ref[...], xsq, (((1,), (0,)), ((), ())),
                         preferred_element_type=jnp.float32)           # (n_h, Bt)

    # cross[(h*out+o)*M+m, b] = sum_d z[o,m,d]/ls[h,d]^2 * x[d,b]  -- one push.
    cross = lax.dot_general(zs_ref[...], xt, (((1,), (0,)), ((), ())),
                            preferred_element_type=jnp.float32)        # (nb*M, Bt)

    # Squared distance (>= 0). Rows grouped by hyper sample to broadcast x2.
    d2 = z2_ref[...] + x2[:, None, :] - 2.0 * cross.reshape(n_h, out * M, Bt)
    d2 = jnp.maximum(d2, 0.0)                # cancellation insurance
    E = jnp.exp(-0.5 * d2).reshape(nb * M, Bt)                         # (nb*M, Bt)

    # Single MXU push for the block-diagonal [C; w] matrix:
    #   rows [0, nb*M)        -> CK    = (sf2^2 C) E   (f_var correction)
    #   rows [nb*M, nb*(M+1)) -> f_mean = (sf2 w) . E
    R = lax.dot_general(wc_ref[...], E, (((1,), (0,)), ((), ())),
                        preferred_element_type=jnp.float32)            # (nb*(M+1), Bt)
    CK = R[:nb * M, :]
    f_mean = R[nb * M:, :]                                             # (nb, Bt)

    # f_var = sf2 + sum_m E * CK.  M == 8 matches the sublane tile, so the
    # reshape + axis-1 reduce is copy-free (for general M, use a block-diag
    # ones pooling matmul instead).
    corr = jnp.sum((E * CK).reshape(nb, M, Bt), axis=1)                # (nb, Bt)
    f_var = jnp.maximum(sf2_ref[...] + corr, var_floor)

    # One lane-dense store per output per batch tile.
    pmu_ref[...] = f_mean
    pvar_ref[...] = f_var


def vargp_forward(x, z, u_mean, u_tril_vec, theta, jitter=1e-6):
    """Forward pass of VARGPRetrain with prev_params=None.

    Returns (pred_mu, pred_var), each (n_hypers, out_size, B) float32.
    """
    n_h = theta.shape[0]
    out_size, M, D = z.shape
    B = x.shape[0]
    nb = n_h * out_size

    sf2 = theta[:, 0].astype(jnp.float32)                  # (n_h,)
    ls = theta[:, 1:].astype(jnp.float32)                  # (n_h, D)

    # q(u): mu, S = L L^T  (rev_cholesky of vec2tril)
    L = vec2tril(u_tril_vec, M)                            # (out, M, M)
    S = L @ jnp.swapaxes(L, -1, -2)                        # (out, M, M)
    mu = u_mean[..., 0]                                    # (out, M)

    # Kzz per hyper + jitter; Cholesky solves (stable vs explicit inverse).
    Kzz = jax.vmap(lambda s, l: rbf_kernel_mat(s, l, z, z))(sf2, ls)   # (n_h,out,M,M)
    Kzz = Kzz + jitter * jnp.eye(M, dtype=Kzz.dtype)
    Lz = jnp.linalg.cholesky(Kzz)

    # Folded small linear algebra (tiny M x M work, once per hyper):
    #   w = Kzz^-1 mu ;  C = Kzz^-1 (S - Kzz) Kzz^-1
    mu_b = jnp.broadcast_to(mu[None, :, :, None], (n_h, out_size, M, 1))
    w = chol_solve(Lz, mu_b)[..., 0]                        # (n_h, out, M)
    SmK = jnp.broadcast_to(S[None], (n_h, out_size, M, M)) - Kzz
    T = chol_solve(Lz, SmK)                                 # Kzz^-1 (S - Kzz)
    C = chol_solve(Lz, jnp.swapaxes(T, -1, -2))             # (n_h, out, M, M)

    # Fold sf2 into the small factors so the kernel works on the pure
    # exponential E (Kzx = sf2 * E):
    w_s = (sf2[:, None, None] * w).reshape(nb, M)                        # sf2 * w
    C_s = ((sf2 * sf2)[:, None, None, None] * C).reshape(nb, M, M)       # sf2^2 * C

    # Block-diagonal [C; w] over (hyper, output) pairs -> single MXU push.
    idx = jnp.arange(nb)
    Cbd = jnp.zeros((nb, M, nb, M), jnp.float32).at[idx, :, idx, :].set(C_s)
    Cbd = Cbd.reshape(nb * M, nb * M)
    Wbd = jnp.zeros((nb, nb, M), jnp.float32).at[idx, idx, :].set(w_s)
    Wbd = Wbd.reshape(nb, nb * M)
    WC = jnp.concatenate([Cbd, Wbd], axis=0)                 # (nb*(M+1), nb*M)

    # z-side per-hyper work hoisted out of the kernel (O(n_h*out*M*D), tiny).
    ils2 = (1.0 / (ls * ls)).astype(jnp.float32)             # (n_h, D)
    zflat = z.reshape(out_size * M, D).astype(jnp.float32)
    zs = (zflat[None] * ils2[:, None, :]).reshape(nb * M, D) # ls^-2-scaled z
    z2 = jnp.sum((zflat * zflat)[None] * ils2[:, None, :], axis=-1)
    z2 = z2.reshape(n_h, out_size * M, 1)                    # ||z/ls||^2

    sf2b = jnp.broadcast_to(sf2[:, None], (n_h, out_size)).reshape(nb, 1)

    # Batch padded to 128-lane tiles; grid over <=512-lane batch tiles
    # (parallel on v7x's two TensorCores, a plain loop on v5e/v6e).
    Bt = min(512, ((B + 127) // 128) * 128)
    Bp = ((B + Bt - 1) // Bt) * Bt
    n_tiles = Bp // Bt
    xt = jnp.zeros((D, Bp), jnp.float32).at[:, :B].set(x.T.astype(jnp.float32))

    kernel = functools.partial(_vargp_pf_diag_kernel, n_h=n_h, out=out_size,
                               M=M, var_floor=float(jitter))

    pmu, pvar = pl.pallas_call(
        kernel,
        out_shape=(jax.ShapeDtypeStruct((nb, Bp), jnp.float32),
                   jax.ShapeDtypeStruct((nb, Bp), jnp.float32)),
        grid=(n_tiles,),
        in_specs=[
            pl.BlockSpec((n_h, D), lambda i: (0, 0)),                 # 1/ls^2
            pl.BlockSpec((D, Bt), lambda i: (0, i)),                  # x^T tile
            pl.BlockSpec((nb * M, D), lambda i: (0, 0)),              # scaled z
            pl.BlockSpec((n_h, out_size * M, 1), lambda i: (0, 0, 0)),  # ||z/ls||^2
            pl.BlockSpec((nb * (M + 1), nb * M), lambda i: (0, 0)),   # blockdiag [C; w]
            pl.BlockSpec((nb, 1), lambda i: (0, 0)),                  # sf2 per row
        ],
        out_specs=(pl.BlockSpec((nb, Bt), lambda i: (0, i)),
                   pl.BlockSpec((nb, Bt), lambda i: (0, i))),
        compiler_params=pltpu.CompilerParams(
            dimension_semantics=("parallel",)),
    )(ils2, xt, zs, z2, WC, sf2b)

    pred_mu = pmu[:, :B].reshape(n_h, out_size, B)
    pred_var = pvar[:, :B].reshape(n_h, out_size, B)
    return pred_mu, pred_var


# Pure-JAX reference (original, un-folded math) for sanity checking the kernel.
def vargp_forward_ref(x, z, u_mean, u_tril_vec, theta, jitter=1e-6):
    out_size, M, D = z.shape
    sf2 = theta[:, 0]
    ls = theta[:, 1:]
    L = vec2tril(u_tril_vec, M)
    S = L @ jnp.swapaxes(L, -1, -2)
    mu = u_mean[..., 0]
    Kzz = jax.vmap(lambda s, l: rbf_kernel_mat(s, l, z, z))(sf2, ls)
    Kzz = Kzz + jitter * jnp.eye(M, dtype=Kzz.dtype)
    Lz = jnp.linalg.cholesky(Kzz)
    xf = jnp.broadcast_to(x[None], (out_size,) + x.shape)
    Kzx = jax.vmap(lambda s, l: rbf_kernel_mat(s, l, z, xf))(sf2, ls)   # (n_h,out,M,B)
    A = chol_solve(Lz, Kzx)                                             # Kzz^-1 Kzx
    f_mean = jnp.einsum('om,homb->hob', mu, A)
    SA = jnp.einsum('omn,honb->homb', S, A)
    f_var = (sf2[:, None, None]
             - jnp.einsum('homb,homb->hob', Kzx, A)
             + jnp.einsum('homb,homb->hob', A, SA))
    return f_mean, f_var


if __name__ == "__main__":
    # Small, forward-consistent shapes.
    B, D, M, out_size, n_v = 64, 16, 8, 4, 3

    key = jax.random.PRNGKey(0)
    k_z, k_mu, k_x, k_hyp = jax.random.split(key, 4)

    # Deterministic parameter init (mirrors __init__ shapes):
    z_init = jax.random.normal(k_z, (out_size, M, D), jnp.float32)          # z_init
    u_mean = 0.5 * jax.random.normal(k_mu, (out_size, M, 1), jnp.float32)   # N(0, 0.5)
    u_tril_vec = jnp.ones((out_size, M * (M + 1) // 2), jnp.float32)        # ones
    # RBF hyper-variational params: lengthscale mean ~ sqrt(D) so Kzx is non-trivial.
    log_mean = jnp.concatenate([jnp.zeros((1,), jnp.float32),
                                jnp.log(4.0) * jnp.ones((D,), jnp.float32)])
    log_logvar = -4.0 * jnp.ones((D + 1,), jnp.float32)
    theta = sample_hypers(k_hyp, log_mean, log_logvar, n_v)                  # (n_v, D+1)

    x = jax.random.normal(k_x, (B, D), jnp.float32)

    pred_mu, pred_var = jax.jit(vargp_forward)(x, z_init, u_mean, u_tril_vec, theta)
    pred_mu = jax.block_until_ready(pred_mu)
    pred_var = jax.block_until_ready(pred_var)

    ref_mu, ref_var = vargp_forward_ref(x, z_init, u_mean, u_tril_vec, theta)
    assert pred_mu.shape == (n_v, out_size, B) and pred_var.shape == (n_v, out_size, B)
    assert jnp.max(jnp.abs(pred_mu - ref_mu)) < 1e-3
    assert jnp.max(jnp.abs(pred_var - ref_var)) < 1e-3

    print("KERNEL_OK")
</pallas_src>

<mosaic_0001>
module attributes {stable_mosaic.version = 11 : i64} {
  func.func private @main(%arg0: i32) attributes {dimension_semantics = [#tpu.dimension_semantics<core_parallel>], iteration_bounds = array<i64: 2>, tpu.core_type = #tpu.core_type<sc_scalar_subcore>, window_params = []} {
    return
  }
}

module attributes {stable_mosaic.version = 11 : i64} {
  func.func private @main(%arg0: i32) attributes {dimension_semantics = [#tpu.dimension_semantics<core_parallel>], iteration_bounds = array<i64: 2>, tpu.core_type = #tpu.core_type<sc_scalar_subcore>, window_params = []} {
    return
  }
}

module attributes {stable_mosaic.version = 11 : i64} {
  func.func @_vargp_pf_diag_kernel(%arg0: i32, %arg1: memref<3x16xf32, #tpu.memory_space<vmem>>, %arg2: memref<16x128xf32, #tpu.memory_space<vmem>>, %arg3: memref<96x16xf32, #tpu.memory_space<vmem>>, %arg4: memref<3x32x1xf32, #tpu.memory_space<vmem>>, %arg5: memref<108x96xf32, #tpu.memory_space<vmem>>, %arg6: memref<12x1xf32, #tpu.memory_space<vmem>>, %arg7: memref<12x128xf32, #tpu.memory_space<vmem>>, %arg8: memref<12x128xf32, #tpu.memory_space<vmem>>) attributes {dimension_semantics = [#tpu.dimension_semantics<parallel>], iteration_bounds = array<i64: 1>, scalar_prefetch = 0 : i64, scratch_operands = 0 : i64, tpu.core_type = #tpu.core_type<tc>, window_params = [{pipeline_mode = #tpu.pipeline_mode<synchronous>, transform_indices = @transform_0, window_bounds = array<i64: 3, 16>}, {transform_indices = @transform_1, window_bounds = array<i64: 16, 128>}, {pipeline_mode = #tpu.pipeline_mode<synchronous>, transform_indices = @transform_2, window_bounds = array<i64: 96, 16>}, {pipeline_mode = #tpu.pipeline_mode<synchronous>, transform_indices = @transform_3, window_bounds = array<i64: 3, 32, 1>}, {pipeline_mode = #tpu.pipeline_mode<synchronous>, transform_indices = @transform_4, window_bounds = array<i64: 108, 96>}, {pipeline_mode = #tpu.pipeline_mode<synchronous>, transform_indices = @transform_5, window_bounds = array<i64: 12, 1>}, {transform_indices = @transform_6, window_bounds = array<i64: 12, 128>}, {transform_indices = @transform_7, window_bounds = array<i64: 12, 128>}]} {
    %c0 = arith.constant 0 : index
    %c0_0 = arith.constant 0 : index
    %0 = vector.load %arg2[%c0, %c0_0] : memref<16x128xf32, #tpu.memory_space<vmem>>, vector<16x128xf32>
    %1 = arith.mulf %0, %0 : vector<16x128xf32>
    %c0_1 = arith.constant 0 : index
    %c0_2 = arith.constant 0 : index
    %2 = vector.load %arg1[%c0_1, %c0_2] : memref<3x16xf32, #tpu.memory_space<vmem>>, vector<3x16xf32>
    %cst = arith.constant dense<0.000000e+00> : vector<3x128xf32>
    %3 = tpu.matmul %2, %1, %cst {dimension_numbers = #tpu.dot_dimension_numbers<[1], [0], [0], [1], [0, 0, 1, 1], [], []>} : vector<3x16xf32>, vector<16x128xf32>, vector<3x128xf32> -> vector<3x128xf32>
    %c0_3 = arith.constant 0 : index
    %c0_4 = arith.constant 0 : index
    %4 = vector.load %arg3[%c0_3, %c0_4] : memref<96x16xf32, #tpu.memory_space<vmem>>, vector<96x16xf32>
    %cst_5 = arith.constant dense<0.000000e+00> : vector<96x128xf32>
    %5 = tpu.matmul %4, %0, %cst_5 {dimension_numbers = #tpu.dot_dimension_numbers<[1], [0], [0], [1], [0, 0, 1, 1], [], []>} : vector<96x16xf32>, vector<16x128xf32>, vector<96x128xf32> -> vector<96x128xf32>
    %c0_6 = arith.constant 0 : index
    %c0_7 = arith.constant 0 : index
    %c0_8 = arith.constant 0 : index
    %6 = vector.load %arg4[%c0_6, %c0_7, %c0_8] : memref<3x32x1xf32, #tpu.memory_space<vmem>>, vector<3x32x1xf32>
    %7 = vector.shape_cast %3 : vector<3x128xf32> to vector<3x1x128xf32>
    %8 = vector.broadcast %6 : vector<3x32x1xf32> to vector<3x32x128xf32>
    %9 = vector.broadcast %7 : vector<3x1x128xf32> to vector<3x32x128xf32>
    %10 = arith.addf %8, %9 : vector<3x32x128xf32>
    %11 = vector.shape_cast %5 : vector<96x128xf32> to vector<3x32x128xf32>
    %cst_9 = arith.constant 2.000000e+00 : f32
    %12 = vector.broadcast %cst_9 : f32 to vector<3x32x128xf32>
    %13 = arith.mulf %12, %11 : vector<3x32x128xf32>
    %14 = arith.subf %10, %13 : vector<3x32x128xf32>
    %cst_10 = arith.constant 0.000000e+00 : f32
    %15 = vector.broadcast %cst_10 : f32 to vector<3x32x128xf32>
    %16 = arith.maximumf %14, %15 : vector<3x32x128xf32>
    %cst_11 = arith.constant -5.000000e-01 : f32
    %17 = vector.broadcast %cst_11 : f32 to vector<3x32x128xf32>
    %18 = arith.mulf %17, %16 : vector<3x32x128xf32>
    %19 = math.exp %18 : vector<3x32x128xf32>
    %20 = vector.shape_cast %19 : vector<3x32x128xf32> to vector<96x128xf32>
    %c0_12 = arith.constant 0 : index
    %c0_13 = arith.constant 0 : index
    %21 = vector.load %arg5[%c0_12, %c0_13] : memref<108x96xf32, #tpu.memory_space<vmem>>, vector<108x96xf32>
    %cst_14 = arith.constant dense<0.000000e+00> : vector<108x128xf32>
    %22 = tpu.matmul %21, %20, %cst_14 {dimension_numbers = #tpu.dot_dimension_numbers<[1], [0], [0], [1], [0, 0, 1, 1], [], []>} : vector<108x96xf32>, vector<96x128xf32>, vector<108x128xf32> -> vector<108x128xf32>
    %23 = vector.extract_strided_slice %22 {offsets = [0, 0], sizes = [96, 128], strides = [1, 1]} : vector<108x128xf32> to vector<96x128xf32>
    %24 = vector.extract_strided_slice %22 {offsets = [96, 0], sizes = [12, 128], strides = [1, 1]} : vector<108x128xf32> to vector<12x128xf32>
    %25 = arith.mulf %20, %23 : vector<96x128xf32>
    %26 = vector.shape_cast %25 : vector<96x128xf32> to vector<12x8x128xf32>
    %cst_15 = arith.constant dense<0.000000e+00> : vector<12x128xf32>
    %27 = vector.multi_reduction <add>, %26, %cst_15 [1] : vector<12x8x128xf32> to vector<12x128xf32>
    %c0_16 = arith.constant 0 : index
    %c0_17 = arith.constant 0 : index
    %28 = vector.load %arg6[%c0_16, %c0_17] : memref<12x1xf32, #tpu.memory_space<vmem>>, vector<12x1xf32>
    %29 = vector.broadcast %28 : vector<12x1xf32> to vector<12x128xf32>
    %30 = arith.addf %29, %27 : vector<12x128xf32>
    %cst_18 = arith.constant 9.99999997E-7 : f32
    %31 = vector.broadcast %cst_18 : f32 to vector<12x128xf32>
    %32 = arith.maximumf %30, %31 : vector<12x128xf32>
    %c0_19 = arith.constant 0 : index
    %c0_20 = arith.constant 0 : index
    %33 = vector.load %arg7[%c0_19, %c0_20] : memref<12x128xf32, #tpu.memory_space<vmem>>, vector<12x128xf32>
    tpu.vector_store %arg7[%c0_19, %c0_20], %24 {strides = array<i32>} : memref<12x128xf32, #tpu.memory_space<vmem>>, vector<12x128xf32>,
    %c0_21 = arith.constant 0 : index
    %c0_22 = arith.constant 0 : index
    %34 = vector.load %arg8[%c0_21, %c0_22] : memref<12x128xf32, #tpu.memory_space<vmem>>, vector<12x128xf32>
    tpu.vector_store %arg8[%c0_21, %c0_22], %32 {strides = array<i32>} : memref<12x128xf32, #tpu.memory_space<vmem>>, vector<12x128xf32>,
    return
  }
  func.func @transform_0(%arg0: i32) -> (i32, i32) {
    %c0_i32 = arith.constant 0 : i32
    %c0_i32_0 = arith.constant 0 : i32
    %c0_i32_1 = arith.constant 0 : i32
    return %c0_i32, %c0_i32_0 : i32, i32
  }
  func.func @transform_1(%arg0: i32) -> (i32, i32) {
    %c0_i32 = arith.constant 0 : i32
    %c0_i32_0 = arith.constant 0 : i32
    return %c0_i32, %arg0 : i32, i32
  }
  func.func @transform_2(%arg0: i32) -> (i32, i32) {
    %c0_i32 = arith.constant 0 : i32
    %c0_i32_0 = arith.constant 0 : i32
    %c0_i32_1 = arith.constant 0 : i32
    return %c0_i32, %c0_i32_0 : i32, i32
  }
  func.func @transform_3(%arg0: i32) -> (i32, i32, i32) {
    %c0_i32 = arith.constant 0 : i32
    %c0_i32_0 = arith.constant 0 : i32
    %c0_i32_1 = arith.constant 0 : i32
    %c0_i32_2 = arith.constant 0 : i32
    return %c0_i32, %c0_i32_0, %c0_i32_1 : i32, i32, i32
  }
  func.func @transform_4(%arg0: i32) -> (i32, i32) {
    %c0_i32 = arith.constant 0 : i32
    %c0_i32_0 = arith.constant 0 : i32
    %c0_i32_1 = arith.constant 0 : i32
    return %c0_i32, %c0_i32_0 : i32, i32
  }
  func.func @transform_5(%arg0: i32) -> (i32, i32) {
    %c0_i32 = arith.constant 0 : i32
    %c0_i32_0 = arith.constant 0 : i32
    %c0_i32_1 = arith.constant 0 : i32
    return %c0_i32, %c0_i32_0 : i32, i32
  }
  func.func @transform_6(%arg0: i32) -> (i32, i32) {
    %c0_i32 = arith.constant 0 : i32
    %c0_i32_0 = arith.constant 0 : i32
    return %c0_i32, %arg0 : i32, i32
  }
  func.func @transform_7(%arg0: i32) -> (i32, i32) {
    %c0_i32 = arith.constant 0 : i32
    %c0_i32_0 = arith.constant 0 : i32
    return %c0_i32, %arg0 : i32, i32
  }
}

</mosaic_0001>

<llo_original>
// kernel: mul.12
$region0: #{mul.12}
  #allocation0 [shape = 's32[1]{0}', space=sflag, size = 0x4, scoped, tag = 'scoped memory for mul.12']
  %s0 = inlined_call_operand.vmem [shape: f32[3], index: 0, kind: input, shape index: {}, may-alias: {0,1}]
  %s1 = inlined_call_operand.vmem [shape: f32[3], index: 1, kind: input, shape index: {}, may-alias: {0,1}]
  %s2 = inlined_call_operand.vmem [shape: f32[3], index: 2, kind: output, shape index: {}]
  %v3 = vld [vmem:[%s0] sm:$0x1]
  %v4 = vld [vmem:[%s1] sm:$0x1]
  %5 = xla_tuple %v3, %v4
  %6 = xla_tuple %5
  %v7 = vmul.f32 %v3, %v4
  %8 = xla_tuple %v7
  %9 = vst [vmem:[%s2] sm:$0x1] %v7

// kernel: custom-call.6
$region0: #{custom-call.6}
  %s0 = inlined_call_operand.vmem [shape: f32[3,4,8,8], index: 0, kind: input, shape index: {}]
  %s1 = inlined_call_operand.vmem [shape: f32[3,4,8,8], index: 1, kind: output, shape index: {}]
  $region1: #{custom-call.6} parent=0
    #allocation0 [shape = 'u8[8192]{0}', space=vmem, size = 0x2000, scoped, tag = 'operand span for operand 0']
    #allocation1 [shape = 'u8[8192]{0}', space=vmem, size = 0x2000, scoped, tag = 'operand span for operand 1']
    loop: start=0, step=1, limit=14
    $region2: #{custom-call.6} parent=1 // loop_pre_header
      _
    $region3: #{custom-call.6} parent=1 // loop_header
      %s3 = sphi 0, %s7
      %p4 = scmp.ge.s32.totalorder %s3, 14
      %s10 = sphi 0, %s36
      %s11 = sphi 0, %s32
      %s12 = sphi 0, %s28
      %s13 = sphi 0, %s24
      %s14 = sphi 0, %s10
      %s15 = sphi 0, %s11
      %s16 = sphi 0, %s12
      %s17 = sphi 0, %s13
      %s18 = sphi 0, %s14
      %s19 = sphi 0, %s15
      %s20 = sphi 0, %s16
      %s21 = sphi 0, %s17
    $region4: #{custom-call.6} parent=1 // loop_header_branch
      %6 = sbr.rel (%p4) target = $region8
    $region5: #{custom-call.6} parent=1 // loop_body
      %s8 = ssub.s32 %s3, 1
      %s9 = ssub.s32 %s3, 2
      %s22 = sadd.s32 1, %s13
      %p23 = scmp.ge.s32.totalorder %s22, 1
      %s24 = scalar_select %p23, 0, %s22
      %s25 = sadd.s32 1, %s12
      %s26 = scalar_select %p23, %s25, %s12
      %p27 = scmp.ge.s32.totalorder %s26, 1
      %s28 = scalar_select %p27, 0, %s26
      %s29 = sadd.s32 1, %s11
      %s30 = scalar_select %p27, %s29, %s11
      %p31 = scmp.ge.s32.totalorder %s30, 4
      %s32 = scalar_select %p31, 0, %s30
      %s33 = sadd.s32 1, %s10
      %s34 = scalar_select %p31, %s33, %s10
      %p35 = scmp.ge.s32.totalorder %s34, 3
      %s36 = scalar_select %p35, 0, %s34
      %p37 = scmp.le.s32.totalorder 1, %s3
      %p38 = scmp.lt.s32.totalorder %s3, 13
      %p39 = pnand %p37, %p38
      %p40 = pneg %p39
      // Predicated region
      $region9: #{custom-call.6} parent=5 // pred_check
        _
      $region10: #{custom-call.6} parent=5 // pred_check_branch
        %42 = sbr.rel (%p39) target = $region12
      $region11: #{custom-call.6} parent=5 // pred_region
        %s43 = ssub.s32 %s3, 1
      $region12: #{custom-call.6} parent=5 // pred_fallthru
        _
      %p44 = scmp.lt.s32.totalorder %s3, 12
      // Predicated region
      $region13: #{custom-call.6} parent=5 // pred_check
        %p45 = pneg %p44
      $region14: #{custom-call.6} parent=5 // pred_check_branch
        %47 = sbr.rel (%p45) target = $region16
      $region15: #{custom-call.6} parent=5 // pred_region
        %s48 = sand.u32 %s3, 1
        %s49 = sand.u32 %s3, 1
        %s50 = smul.addr %s49, 8
        %s51 = scalar_lea.vmem [#allocation0], %s50
        %s52 = sadd.s32 %s13, %s12
        %s53 = sadd.s32 %s52, %s11
        %s54 = smul.addr %s10, 4
        %s55 = sadd.s32 %s53, %s54
        %s56 = smul.addr %s55, 8
        %s57 = scalar_lea.vmem %s0, %s56
        // Predicated region
        $region17: #{custom-call.6} parent=15 // pred_check
          _
        $region18: #{custom-call.6} parent=15 // pred_check_branch
          %59 = sbr.rel (0) target = $region20
        $region19: #{custom-call.6} parent=15 // pred_region
          // Predicated region
          $region21: #{custom-call.6} parent=19 // pred_check
            _
          $region22: #{custom-call.6} parent=19 // pred_check_branch
            %61 = sbr.rel (0) target = $region24
          $region23: #{custom-call.6} parent=19 // pred_region
            // Predicated region
            $region36: #{custom-call.6} parent=23 // pred_check
              _
            $region37: #{custom-call.6} parent=23 // pred_check_branch
              %76 = sbr.rel (0) target = $region39
            $region38: #{custom-call.6} parent=23 // pred_region
              loop: start=0, step=1, limit=1
              $region40: #{custom-call.6} parent=38 // loop_pre_header
                _
              $region41: #{custom-call.6} parent=38 // loop_header
                %s78 = sphi 0, %s82
                %p79 = scmp.ge.s32.totalorder %s78, 1
                %s83 = sphi %s57, %s57
                %s84 = sphi %s51, %s51
              $region42: #{custom-call.6} parent=38 // loop_header_branch
                %81 = sbr.rel (%p79) target = $region46
              $region43: #{custom-call.6} parent=38 // loop_body
                %v85 = vld [vmem:[%s83] sm:$0xff]
                %86 = vst [vmem:[%s84] sm:$0xff] %v85
              $region44: #{custom-call.6} parent=38 // loop_footer
                %s82 = sadd.s32 1, %s78
              $region45: #{custom-call.6} parent=38 // loop_footer_branch
                %77 = sbr.rel target = $region41
              $region46: #{custom-call.6} parent=38 // loop_exit
                _
            $region39: #{custom-call.6} parent=23 // pred_fallthru
              _
            // Predicated region
            $region47: #{custom-call.6} parent=23 // pred_check
              _
            $region48: #{custom-call.6} parent=23 // pred_check_branch
              %88 = sbr.rel target = $region50
            $region49: #{custom-call.6} parent=23 // pred_region
              _
            $region50: #{custom-call.6} parent=23 // pred_fallthru
              _
          $region24: #{custom-call.6} parent=19 // pred_fallthru
            _
          // Predicated region
          $region25: #{custom-call.6} parent=19 // pred_check
            _
          $region26: #{custom-call.6} parent=19 // pred_check_branch
            %63 = sbr.rel target = $region28
          $region27: #{custom-call.6} parent=19 // pred_region
            loop: start=0, step=1, limit=1
            $region29: #{custom-call.6} parent=27 // loop_pre_header
              _
            $region30: #{custom-call.6} parent=27 // loop_header
              %s66 = sphi 0, %s70
              %p67 = scmp.ge.s32.totalorder %s66, 1
              %s71 = sphi %s57, %s57
              %s72 = sphi %s51, %s51
            $region31: #{custom-call.6} parent=27 // loop_header_branch
              %69 = sbr.rel (%p67) target = $region35
            $region32: #{custom-call.6} parent=27 // loop_body
              %v73 = vld [vmem:[%s71] sm:$0xff]
              %74 = vst [vmem:[%s72] sm:$0xff] %v73
            $region33: #{custom-call.6} parent=27 // loop_footer
              %s70 = sadd.s32 1, %s66
            $region34: #{custom-call.6} parent=27 // loop_footer_branch
              %65 = sbr.rel target = $region30
            $region35: #{custom-call.6} parent=27 // loop_exit
              _
          $region28: #{custom-call.6} parent=19 // pred_fallthru
            _
        $region20: #{custom-call.6} parent=15 // pred_fallthru
          _
        %89 = vnop
      $region16: #{custom-call.6} parent=5 // pred_fallthru
        _
      %p90 = scmp.le.s32.totalorder 1, %s3
      %p91 = scmp.lt.s32.totalorder %s3, 13
      %p92 = pnand %p90, %p91
      %p93 = pneg %p92
      // Predicated region
      $region51: #{custom-call.6} parent=5 // pred_check
        _
      $region52: #{custom-call.6} parent=5 // pred_check_branch
        %95 = sbr.rel (%p92) target = $region54
      $region53: #{custom-call.6} parent=5 // pred_region
        %s96 = ssub.s32 %s3, 1
        %s97 = sand.u32 %s8, 1
        %s98 = sand.u32 %s8, 1
        %s99 = smul.addr %s98, 8
        %s100 = scalar_lea.vmem [#allocation0], %s99
        %s101 = sand.u32 %s8, 1
        %s102 = sand.u32 %s8, 1
        %s103 = smul.addr %s102, 8
        %s104 = scalar_lea.vmem [#allocation0], %s103
        %s105 = sand.u32 %s8, 1
        %s106 = sand.u32 %s8, 1
        %s107 = smul.addr %s106, 8
        %s108 = scalar_lea.vmem [#allocation1], %s107
        %109 = vst [vmem:[%s108] sm:$0xff] 0.0
        %vm110 = vcmask 7168
        %v111 = vld [vmem:[%s108] ss:$0 sm:$0xff]
        %v112 = vld [vmem:[%s100] ss:$0 sm:$0xff]
        %v113 = vmul.f32 %v111, %v111
        %114 = vadd.xlane.f32.xlu0 %v113
        %v115 = vpop.xlane.xlu0 %114
        %v116 = vsub.f32 %v112, %v115
        %v117 = vrsqrt.pop %v116
        %v118 = vld [vmem:[%s100] sm:$0xff]
        %v119 = vld [vmem:[%s108] sm:$0xff]
        %v120 = vmul.f32 %v119, %v111
        %121 = vadd.xlane.f32.xlu0 %v120
        %v122 = vpop.xlane.xlu0 %121
        %v123 = vsub.f32 %v118, %v122
        %v124 = vmul.f32 %v123, %v117
        %v125 = vsel %vm110, %v124, 0.0
        %v126 = vadd.f32 %v119, %v125
        %127 = vst [vmem:[%s108] sm:$0xff] %v126
        %vm128 = vcmask 15368
        %s129 = scalar_lea.vmem %s108, 1 [#allocation1]
        %v130 = vld [vmem:[%s129] ss:$0 sm:$0xff]
        %s131 = scalar_lea.vmem %s100, 1 [#allocation0]
        %v132 = vld [vmem:[%s131] ss:$0 sm:$0xff]
        %v133 = vmul.f32 %v130, %v130
        %134 = vadd.xlane.f32.xlu0 %v133
        %v135 = vpop.xlane.xlu0 %134
        %v136 = vsub.f32 %v132, %v135
        %v137 = vrsqrt.pop %v136
        %v138 = vld [vmem:[%s100] sm:$0xff]
        %v139 = vld [vmem:[%s108] sm:$0xff]
        %v140 = vmul.f32 %v139, %v130
        %141 = vadd.xlane.f32.xlu0 %v140
        %v142 = vpop.xlane.xlu0 %141
        %v143 = vsub.f32 %v138, %v142
        %v144 = vmul.f32 %v143, %v137
        %vm145 = vcmask 1047553
        %vm146 = vmand %vm128, %vm145
        %v147 = vsel %vm146, %v144, 0.0
        %v148 = vadd.f32 %v139, %v147
        %149 = vst [vmem:[%s108] sm:$0xff] %v148
        %vm150 = vcmask 23568
        %s151 = scalar_lea.vmem %s108, 2 [#allocation1]
        %v152 = vld [vmem:[%s151] ss:$0 sm:$0xff]
        %s153 = scalar_lea.vmem %s100, 2 [#allocation0]
        %v154 = vld [vmem:[%s153] ss:$0 sm:$0xff]
        %v155 = vmul.f32 %v152, %v152
        %156 = vadd.xlane.f32.xlu0 %v155
        %v157 = vpop.xlane.xlu0 %156
        %v158 = vsub.f32 %v154, %v157
        %v159 = vrsqrt.pop %v158
        %v160 = vld [vmem:[%s100] sm:$0xff]
        %v161 = vld [vmem:[%s108] sm:$0xff]
        %v162 = vmul.f32 %v161, %v152
        %163 = vadd.xlane.f32.xlu0 %v162
        %v164 = vpop.xlane.xlu0 %163
        %v165 = vsub.f32 %v160, %v164
        %v166 = vmul.f32 %v165, %v159
        %vm167 = vcmask 1047554
        %vm168 = vmand %vm150, %vm167
        %v169 = vsel %vm168, %v166, 0.0
        %v170 = vadd.f32 %v161, %v169
        %171 = vst [vmem:[%s108] sm:$0xff] %v170
        %vm172 = vcmask 31768
        %s173 = scalar_lea.vmem %s108, 3 [#allocation1]
        %v174 = vld [vmem:[%s173] ss:$0 sm:$0xff]
        %s175 = scalar_lea.vmem %s100, 3 [#allocation0]
        %v176 = vld [vmem:[%s175] ss:$0 sm:$0xff]
        %v177 = vmul.f32 %v174, %v174
        %178 = vadd.xlane.f32.xlu0 %v177
        %v179 = vpop.xlane.xlu0 %178
        %v180 = vsub.f32 %v176, %v179
        %v181 = vrsqrt.pop %v180
        %v182 = vld [vmem:[%s100] sm:$0xff]
        %v183 = vld [vmem:[%s108] sm:$0xff]
        %v184 = vmul.f32 %v183, %v174
        %185 = vadd.xlane.f32.xlu0 %v184
        %v186 = vpop.xlane.xlu0 %185
        %v187 = vsub.f32 %v182, %v186
        %v188 = vmul.f32 %v187, %v181
        %vm189 = vcmask 1047555
        %vm190 = vmand %vm172, %vm189
        %v191 = vsel %vm190, %v188, 0.0
        %v192 = vadd.f32 %v183, %v191
        %193 = vst [vmem:[%s108] sm:$0xff] %v192
        %vm194 = vcmask 39968
        %s195 = scalar_lea.vmem %s108, 4 [#allocation1]
        %v196 = vld [vmem:[%s195] ss:$0 sm:$0xff]
        %s197 = scalar_lea.vmem %s100, 4 [#allocation0]
        %v198 = vld [vmem:[%s197] ss:$0 sm:$0xff]
        %v199 = vmul.f32 %v196, %v196
        %200 = vadd.xlane.f32.xlu0 %v199
        %v201 = vpop.xlane.xlu0 %200
        %v202 = vsub.f32 %v198, %v201
        %v203 = vrsqrt.pop %v202
        %v204 = vld [vmem:[%s100] sm:$0xff]
        %v205 = vld [vmem:[%s108] sm:$0xff]
        %v206 = vmul.f32 %v205, %v196
        %207 = vadd.xlane.f32.xlu0 %v206
        %v208 = vpop.xlane.xlu0 %207
        %v209 = vsub.f32 %v204, %v208
        %v210 = vmul.f32 %v209, %v203
        %vm211 = vcmask 1047556
        %vm212 = vmand %vm194, %vm211
        %v213 = vsel %vm212, %v210, 0.0
        %v214 = vadd.f32 %v205, %v213
        %215 = vst [vmem:[%s108] sm:$0xff] %v214
        %vm216 = vcmask 48168
        %s217 = scalar_lea.vmem %s108, 5 [#allocation1]
        %v218 = vld [vmem:[%s217] ss:$0 sm:$0xff]
        %s219 = scalar_lea.vmem %s100, 5 [#allocation0]
        %v220 = vld [vmem:[%s219] ss:$0 sm:$0xff]
        %v221 = vmul.f32 %v218, %v218
        %222 = vadd.xlane.f32.xlu0 %v221
        %v223 = vpop.xlane.xlu0 %222
        %v224 = vsub.f32 %v220, %v223
        %v225 = vrsqrt.pop %v224
        %v226 = vld [vmem:[%s100] sm:$0xff]
        %v227 = vld [vmem:[%s108] sm:$0xff]
        %v228 = vmul.f32 %v227, %v218
        %229 = vadd.xlane.f32.xlu0 %v228
        %v230 = vpop.xlane.xlu0 %229
        %v231 = vsub.f32 %v226, %v230
        %v232 = vmul.f32 %v231, %v225
        %vm233 = vcmask 1047557
        %vm234 = vmand %vm216, %vm233
        %v235 = vsel %vm234, %v232, 0.0
        %v236 = vadd.f32 %v227, %v235
        %237 = vst [vmem:[%s108] sm:$0xff] %v236
        %vm238 = vcmask 56368
        %s239 = scalar_lea.vmem %s108, 6 [#allocation1]
        %v240 = vld [vmem:[%s239] ss:$0 sm:$0xff]
        %s241 = scalar_lea.vmem %s100, 6 [#allocation0]
        %v242 = vld [vmem:[%s241] ss:$0 sm:$0xff]
        %v243 = vmul.f32 %v240, %v240
        %244 = vadd.xlane.f32.xlu0 %v243
        %v245 = vpop.xlane.xlu0 %244
        %v246 = vsub.f32 %v242, %v245
        %v247 = vrsqrt.pop %v246
        %v248 = vld [vmem:[%s100] sm:$0xff]
        %v249 = vld [vmem:[%s108] sm:$0xff]
        %v250 = vmul.f32 %v249, %v240
        %251 = vadd.xlane.f32.xlu0 %v250
        %v252 = vpop.xlane.xlu0 %251
        %v253 = vsub.f32 %v248, %v252
        %v254 = vmul.f32 %v253, %v247
        %vm255 = vcmask 1047558
        %vm256 = vmand %vm238, %vm255
        %v257 = vsel %vm256, %v254, 0.0
        %v258 = vadd.f32 %v249, %v257
        %259 = vst [vmem:[%s108] sm:$0xff] %v258
        %vm260 = vcmask 64568
        %s261 = scalar_lea.vmem %s108, 7 [#allocation1]
        %v262 = vld [vmem:[%s261] ss:$0 sm:$0xff]
        %s263 = scalar_lea.vmem %s100, 7 [#allocation0]
        %v264 = vld [vmem:[%s263] ss:$0 sm:$0xff]
        %v265 = vmul.f32 %v262, %v262
        %266 = vadd.xlane.f32.xlu0 %v265
        %v267 = vpop.xlane.xlu0 %266
        %v268 = vsub.f32 %v264, %v267
        %v269 = vrsqrt.pop %v268
        %v270 = vld [vmem:[%s100] sm:$0xff]
        %v271 = vld [vmem:[%s108] sm:$0xff]
        %v272 = vmul.f32 %v271, %v262
        %273 = vadd.xlane.f32.xlu0 %v272
        %v274 = vpop.xlane.xlu0 %273
        %v275 = vsub.f32 %v270, %v274
        %v276 = vmul.f32 %v275, %v269
        %vm277 = vcmask 1047559
        %vm278 = vmand %vm260, %vm277
        %v279 = vsel %vm278, %v276, 0.0
        %v280 = vadd.f32 %v271, %v279
        %281 = vst [vmem:[%s108] sm:$0xff] %v280
        %s282 = sand.u32 %s8, 1
        %s283 = sand.u32 %s8, 1
        %s284 = smul.addr %s283, 8
        %s285 = scalar_lea.vmem [#allocation1], %s284
        %s286 = sadd.s32 %s17, %s16
        %s287 = sadd.s32 %s286, %s15
        %s288 = smul.addr %s14, 4
        %s289 = sadd.s32 %s287, %s288
        %s290 = smul.addr %s289, 8
        %s291 = scalar_lea.vmem %s1, %s290
        // Predicated region
        $region55: #{custom-call.6} parent=53 // pred_check
          _
        $region56: #{custom-call.6} parent=53 // pred_check_branch
          %293 = sbr.rel (0) target = $region58
        $region57: #{custom-call.6} parent=53 // pred_region
          // Predicated region
          $region59: #{custom-call.6} parent=57 // pred_check
            _
          $region60: #{custom-call.6} parent=57 // pred_check_branch
            %295 = sbr.rel (0) target = $region62
          $region61: #{custom-call.6} parent=57 // pred_region
            // Predicated region
            $region74: #{custom-call.6} parent=61 // pred_check
              _
            $region75: #{custom-call.6} parent=61 // pred_check_branch
              %310 = sbr.rel (0) target = $region77
            $region76: #{custom-call.6} parent=61 // pred_region
              loop: start=0, step=1, limit=1
              $region78: #{custom-call.6} parent=76 // loop_pre_header
                _
              $region79: #{custom-call.6} parent=76 // loop_header
                %s312 = sphi 0, %s316
                %p313 = scmp.ge.s32.totalorder %s312, 1
                %s317 = sphi %s285, %s285
                %s318 = sphi %s291, %s291
              $region80: #{custom-call.6} parent=76 // loop_header_branch
                %315 = sbr.rel (%p313) target = $region84
              $region81: #{custom-call.6} parent=76 // loop_body
                %v319 = vld [vmem:[%s317] sm:$0xff]
                %320 = vst [vmem:[%s318] sm:$0xff] %v319
              $region82: #{custom-call.6} parent=76 // loop_footer
                %s316 = sadd.s32 1, %s312
              $region83: #{custom-call.6} parent=76 // loop_footer_branch
                %311 = sbr.rel target = $region79
              $region84: #{custom-call.6} parent=76 // loop_exit
                _
            $region77: #{custom-call.6} parent=61 // pred_fallthru
              _
            // Predicated region
            $region85: #{custom-call.6} parent=61 // pred_check
              _
            $region86: #{custom-call.6} parent=61 // pred_check_branch
              %322 = sbr.rel target = $region88
            $region87: #{custom-call.6} parent=61 // pred_region
              _
            $region88: #{custom-call.6} parent=61 // pred_fallthru
              _
          $region62: #{custom-call.6} parent=57 // pred_fallthru
            _
          // Predicated region
          $region63: #{custom-call.6} parent=57 // pred_check
            _
          $region64: #{custom-call.6} parent=57 // pred_check_branch
            %297 = sbr.rel target = $region66
          $region65: #{custom-call.6} parent=57 // pred_region
            loop: start=0, step=1, limit=1
            $region67: #{custom-call.6} parent=65 // loop_pre_header
              _
            $region68: #{custom-call.6} parent=65 // loop_header
              %s300 = sphi 0, %s304
              %p301 = scmp.ge.s32.totalorder %s300, 1
              %s305 = sphi %s285, %s285
              %s306 = sphi %s291, %s291
            $region69: #{custom-call.6} parent=65 // loop_header_branch
              %303 = sbr.rel (%p301) target = $region73
            $region70: #{custom-call.6} parent=65 // loop_body
              %v307 = vld [vmem:[%s305] sm:$0xff]
              %308 = vst [vmem:[%s306] sm:$0xff] %v307
            $region71: #{custom-call.6} parent=65 // loop_footer
              %s304 = sadd.s32 1, %s300
            $region72: #{custom-call.6} parent=65 // loop_footer_branch
              %299 = sbr.rel target = $region68
            $region73: #{custom-call.6} parent=65 // loop_exit
              _
          $region66: #{custom-call.6} parent=57 // pred_fallthru
            _
        $region58: #{custom-call.6} parent=53 // pred_fallthru
          _
        %323 = vnop
      $region54: #{custom-call.6} parent=5 // pred_fallthru
        _
      %p324 = scmp.le.s32.totalorder 2, %s3
      // Predicated region
      $region89: #{custom-call.6} parent=5 // pred_check
        %p325 = pneg %p324
      $region90: #{custom-call.6} parent=5 // pred_check_branch
        %327 = sbr.rel (%p325) target = $region92
      $region91: #{custom-call.6} parent=5 // pred_region
        %s328 = ssub.s32 %s3, 2
        %s329 = sand.u32 %s9, 1
        %s330 = sand.u32 %s9, 1
        %s331 = smul.addr %s330, 8
        %s332 = scalar_lea.vmem [#allocation1], %s331
      $region92: #{custom-call.6} parent=5 // pred_fallthru
        _
    $region6: #{custom-call.6} parent=1 // loop_footer
      %s7 = sadd.s32 1, %s3
    $region7: #{custom-call.6} parent=1 // loop_footer_branch
      %2 = sbr.rel target = $region3
    $region8: #{custom-call.6} parent=1 // loop_exit
      _

// kernel: custom-call.20
$region0: #{custom-call.20}
  %s0 = inlined_call_operand.vmem [shape: f32[3,4,1,8,8], index: 0, kind: input, shape index: {}]
  %s1 = inlined_call_operand.vmem [shape: f32[3,4,1,8,8], index: 1, kind: output, shape index: {}]
  $region1: #{custom-call.20} parent=0
    #allocation0 [shape = 'u8[8192]{0}', space=vmem, size = 0x2000, scoped, tag = 'operand span for operand 0']
    #allocation1 [shape = 'u8[8192]{0}', space=vmem, size = 0x2000, scoped, tag = 'operand span for operand 1']
    loop: start=0, step=1, limit=14
    $region2: #{custom-call.20} parent=1 // loop_pre_header
      _
    $region3: #{custom-call.20} parent=1 // loop_header
      %s3 = sphi 0, %s7
      %p4 = scmp.ge.s32.totalorder %s3, 14
      %s10 = sphi 0, %s43
      %s11 = sphi 0, %s39
      %s12 = sphi 0, %s35
      %s13 = sphi 0, %s31
      %s14 = sphi 0, %s27
      %s15 = sphi 0, %s10
      %s16 = sphi 0, %s11
      %s17 = sphi 0, %s12
      %s18 = sphi 0, %s13
      %s19 = sphi 0, %s14
      %s20 = sphi 0, %s15
      %s21 = sphi 0, %s16
      %s22 = sphi 0, %s17
      %s23 = sphi 0, %s18
      %s24 = sphi 0, %s19
    $region4: #{custom-call.20} parent=1 // loop_header_branch
      %6 = sbr.rel (%p4) target = $region8
    $region5: #{custom-call.20} parent=1 // loop_body
      %s8 = ssub.s32 %s3, 1
      %s9 = ssub.s32 %s3, 2
      %s25 = sadd.s32 1, %s14
      %p26 = scmp.ge.s32.totalorder %s25, 1
      %s27 = scalar_select %p26, 0, %s25
      %s28 = sadd.s32 1, %s13
      %s29 = scalar_select %p26, %s28, %s13
      %p30 = scmp.ge.s32.totalorder %s29, 1
      %s31 = scalar_select %p30, 0, %s29
      %s32 = sadd.s32 1, %s12
      %s33 = scalar_select %p30, %s32, %s12
      %p34 = scmp.ge.s32.totalorder %s33, 1
      %s35 = scalar_select %p34, 0, %s33
      %s36 = sadd.s32 1, %s11
      %s37 = scalar_select %p34, %s36, %s11
      %p38 = scmp.ge.s32.totalorder %s37, 4
      %s39 = scalar_select %p38, 0, %s37
      %s40 = sadd.s32 1, %s10
      %s41 = scalar_select %p38, %s40, %s10
      %p42 = scmp.ge.s32.totalorder %s41, 3
      %s43 = scalar_select %p42, 0, %s41
      %p44 = scmp.le.s32.totalorder 1, %s3
      %p45 = scmp.lt.s32.totalorder %s3, 13
      %p46 = pnand %p44, %p45
      %p47 = pneg %p46
      // Predicated region
      $region9: #{custom-call.20} parent=5 // pred_check
        _
      $region10: #{custom-call.20} parent=5 // pred_check_branch
        %49 = sbr.rel (%p46) target = $region12
      $region11: #{custom-call.20} parent=5 // pred_region
        %s50 = ssub.s32 %s3, 1
      $region12: #{custom-call.20} parent=5 // pred_fallthru
        _
      %p51 = scmp.lt.s32.totalorder %s3, 12
      // Predicated region
      $region13: #{custom-call.20} parent=5 // pred_check
        %p52 = pneg %p51
      $region14: #{custom-call.20} parent=5 // pred_check_branch
        %54 = sbr.rel (%p52) target = $region16
      $region15: #{custom-call.20} parent=5 // pred_region
        %s55 = sand.u32 %s3, 1
        %s56 = sand.u32 %s3, 1
        %s57 = smul.addr %s56, 8
        %s58 = scalar_lea.vmem [#allocation0], %s57
        %s59 = sadd.s32 %s14, %s13
        %s60 = sadd.s32 %s59, %s12
        %s61 = sadd.s32 %s60, %s11
        %s62 = smul.addr %s10, 4
        %s63 = sadd.s32 %s61, %s62
        %s64 = smul.addr %s63, 8
        %s65 = scalar_lea.vmem %s0, %s64
        // Predicated region
        $region17: #{custom-call.20} parent=15 // pred_check
          _
        $region18: #{custom-call.20} parent=15 // pred_check_branch
          %67 = sbr.rel (0) target = $region20
        $region19: #{custom-call.20} parent=15 // pred_region
          // Predicated region
          $region21: #{custom-call.20} parent=19 // pred_check
            _
          $region22: #{custom-call.20} parent=19 // pred_check_branch
            %69 = sbr.rel (0) target = $region24
          $region23: #{custom-call.20} parent=19 // pred_region
            // Predicated region
            $region36: #{custom-call.20} parent=23 // pred_check
              _
            $region37: #{custom-call.20} parent=23 // pred_check_branch
              %84 = sbr.rel (0) target = $region39
            $region38: #{custom-call.20} parent=23 // pred_region
              loop: start=0, step=1, limit=1
              $region40: #{custom-call.20} parent=38 // loop_pre_header
                _
              $region41: #{custom-call.20} parent=38 // loop_header
                %s86 = sphi 0, %s90
                %p87 = scmp.ge.s32.totalorder %s86, 1
                %s91 = sphi %s65, %s65
                %s92 = sphi %s58, %s58
              $region42: #{custom-call.20} parent=38 // loop_header_branch
                %89 = sbr.rel (%p87) target = $region46
              $region43: #{custom-call.20} parent=38 // loop_body
                %v93 = vld [vmem:[%s91] sm:$0xff]
                %94 = vst [vmem:[%s92] sm:$0xff] %v93
              $region44: #{custom-call.20} parent=38 // loop_footer
                %s90 = sadd.s32 1, %s86
              $region45: #{custom-call.20} parent=38 // loop_footer_branch
                %85 = sbr.rel target = $region41
              $region46: #{custom-call.20} parent=38 // loop_exit
                _
            $region39: #{custom-call.20} parent=23 // pred_fallthru
              _
            // Predicated region
            $region47: #{custom-call.20} parent=23 // pred_check
              _
            $region48: #{custom-call.20} parent=23 // pred_check_branch
              %96 = sbr.rel target = $region50
            $region49: #{custom-call.20} parent=23 // pred_region
              _
            $region50: #{custom-call.20} parent=23 // pred_fallthru
              _
          $region24: #{custom-call.20} parent=19 // pred_fallthru
            _
          // Predicated region
          $region25: #{custom-call.20} parent=19 // pred_check
            _
          $region26: #{custom-call.20} parent=19 // pred_check_branch
            %71 = sbr.rel target = $region28
          $region27: #{custom-call.20} parent=19 // pred_region
            loop: start=0, step=1, limit=1
            $region29: #{custom-call.20} parent=27 // loop_pre_header
              _
            $region30: #{custom-call.20} parent=27 // loop_header
              %s74 = sphi 0, %s78
              %p75 = scmp.ge.s32.totalorder %s74, 1
              %s79 = sphi %s65, %s65
              %s80 = sphi %s58, %s58
            $region31: #{custom-call.20} parent=27 // loop_header_branch
              %77 = sbr.rel (%p75) target = $region35
            $region32: #{custom-call.20} parent=27 // loop_body
              %v81 = vld [vmem:[%s79] sm:$0xff]
              %82 = vst [vmem:[%s80] sm:$0xff] %v81
            $region33: #{custom-call.20} parent=27 // loop_footer
              %s78 = sadd.s32 1, %s74
            $region34: #{custom-call.20} parent=27 // loop_footer_branch
              %73 = sbr.rel target = $region30
            $region35: #{custom-call.20} parent=27 // loop_exit
              _
          $region28: #{custom-call.20} parent=19 // pred_fallthru
            _
        $region20: #{custom-call.20} parent=15 // pred_fallthru
          _
        %97 = vnop
      $region16: #{custom-call.20} parent=5 // pred_fallthru
        _
      %p98 = scmp.le.s32.totalorder 1, %s3
      %p99 = scmp.lt.s32.totalorder %s3, 13
      %p100 = pnand %p98, %p99
      %p101 = pneg %p100
      // Predicated region
      $region51: #{custom-call.20} parent=5 // pred_check
        _
      $region52: #{custom-call.20} parent=5 // pred_check_branch
        %103 = sbr.rel (%p100) target = $region54
      $region53: #{custom-call.20} parent=5 // pred_region
        #allocation2 [shape = 'f32[8,8]{1,0}', space=vmem, size = 0x1000, scoped, tag = 'rescaled input a']
        %s104 = ssub.s32 %s3, 1
        %s105 = sand.u32 %s8, 1
        %s106 = sand.u32 %s8, 1
        %s107 = smul.addr %s106, 8
        %s108 = scalar_lea.vmem [#allocation0], %s107
        %s109 = sand.u32 %s8, 1
        %s110 = sand.u32 %s8, 1
        %s111 = smul.addr %s110, 8
        %s112 = scalar_lea.vmem [#allocation0], %s111
        %s113 = sand.u32 %s8, 1
        %s114 = sand.u32 %s8, 1
        %s115 = smul.addr %s114, 8
        %s116 = scalar_lea.vmem [#allocation1], %s115
        %v117 = vlaneseq
        %v118 = vand.u32 %v117, 127
        %vm119 = vcmp.lt.s32.totalorder %v118, 8
        %v120 = vlaneseq
        %v121 = vshrl.u32 %v120, 7
        %vm123 = vcmp.eq.s32.totalorder %v121, %v118
        %v124 = vld [vmem:[%s108] sm:$0xff]
        %v125 = vsel %vm123, %v124, 0.0
        %126 = vadd.xlane.f32.xlu0 %v125
        %v127 = vpop.xlane.xlu0 %126
        %vm128 = vcmp.ge.s32.totalorder %v121, %v118
        %vm129 = vmand %vm128, %vm119
        %v130 = vsel %vm129, %v124, 0.0
        %v131 = vrcp.pop %v127
        %v132 = vmul.f32 %v130, %v131
        %133 = vst [vmem:[#allocation2] sm:$0xff] %v132
        %v134 = vlaneseq
        %v135 = vand.u32 %v134, 127
        %v136 = vlaneseq
        %v137 = vshrl.u32 %v136, 7
        %vm139 = vcmp.eq.s32.totalorder %v135, %v137
        %v140 = vlaneseq
        %v141 = vand.u32 %v140, 127
        %vm142 = vcmp.eq.s32.totalorder %v141, 0
        %v143 = vsel %vm142, 1.0, -1.0
        %v144 = vsel %vm139, %v143, 0.0
        %s145 = scalar_lea.vmem [#allocation2], 1
        %v146 = vld [vmem:[%s145] ss:$0 sm:$0xff]
        %v147 = vxor.u32 %v146, 2147483648
        %v148 = vlaneseq
        %v149 = vand.u32 %v148, 127
        %vm150 = vcmp.eq.s32.totalorder %v149, 1
        %v151 = vmul.f32 %v147, %v144
        %152 = vadd.xlane.f32.xlu0 %v151
        %v153 = vpop.xlane.xlu0 %152
        %v154 = vsel %vm150, %v153, %v144
        %s155 = scalar_lea.vmem [#allocation2], 2
        %v156 = vld [vmem:[%s155] ss:$0 sm:$0xff]
        %v157 = vxor.u32 %v156, 2147483648
        %v158 = vlaneseq
        %v159 = vand.u32 %v158, 127
        %vm160 = vcmp.eq.s32.totalorder %v159, 2
        %v161 = vmul.f32 %v157, %v154
        %162 = vadd.xlane.f32.xlu0 %v161
        %v163 = vpop.xlane.xlu0 %162
        %v164 = vsel %vm160, %v163, %v154
        %s165 = scalar_lea.vmem [#allocation2], 3
        %v166 = vld [vmem:[%s165] ss:$0 sm:$0xff]
        %v167 = vxor.u32 %v166, 2147483648
        %v168 = vlaneseq
        %v169 = vand.u32 %v168, 127
        %vm170 = vcmp.eq.s32.totalorder %v169, 3
        %v171 = vmul.f32 %v167, %v164
        %172 = vadd.xlane.f32.xlu0 %v171
        %v173 = vpop.xlane.xlu0 %172
        %v174 = vsel %vm170, %v173, %v164
        %s175 = scalar_lea.vmem [#allocation2], 4
        %v176 = vld [vmem:[%s175] ss:$0 sm:$0xff]
        %v177 = vxor.u32 %v176, 2147483648
        %v178 = vlaneseq
        %v179 = vand.u32 %v178, 127
        %vm180 = vcmp.eq.s32.totalorder %v179, 4
        %v181 = vmul.f32 %v177, %v174
        %182 = vadd.xlane.f32.xlu0 %v181
        %v183 = vpop.xlane.xlu0 %182
        %v184 = vsel %vm180, %v183, %v174
        %s185 = scalar_lea.vmem [#allocation2], 5
        %v186 = vld [vmem:[%s185] ss:$0 sm:$0xff]
        %v187 = vxor.u32 %v186, 2147483648
        %v188 = vlaneseq
        %v189 = vand.u32 %v188, 127
        %vm190 = vcmp.eq.s32.totalorder %v189, 5
        %v191 = vmul.f32 %v187, %v184
        %192 = vadd.xlane.f32.xlu0 %v191
        %v193 = vpop.xlane.xlu0 %192
        %v194 = vsel %vm190, %v193, %v184
        %s195 = scalar_lea.vmem [#allocation2], 6
        %v196 = vld [vmem:[%s195] ss:$0 sm:$0xff]
        %v197 = vxor.u32 %v196, 2147483648
        %v198 = vlaneseq
        %v199 = vand.u32 %v198, 127
        %vm200 = vcmp.eq.s32.totalorder %v199, 6
        %v201 = vmul.f32 %v197, %v194
        %202 = vadd.xlane.f32.xlu0 %v201
        %v203 = vpop.xlane.xlu0 %202
        %v204 = vsel %vm200, %v203, %v194
        %s205 = scalar_lea.vmem [#allocation2], 7
        %v206 = vld [vmem:[%s205] ss:$0 sm:$0xff]
        %v207 = vxor.u32 %v206, 2147483648
        %v208 = vlaneseq
        %v209 = vand.u32 %v208, 127
        %vm210 = vcmp.eq.s32.totalorder %v209, 7
        %v211 = vmul.f32 %v207, %v204
        %212 = vadd.xlane.f32.xlu0 %v211
        %v213 = vpop.xlane.xlu0 %212
        %v214 = vsel %vm210, %v213, %v204
        %v215 = vrcp.pop %v127
        %v216 = vmul.f32 %v214, %v215
        %vm217 = vweird.f32 %v127
        %v218 = vsel %vm217, %v214, %v216
        %219 = vst [vmem:[%s116] sm:$0xff] %v218
        %s220 = sand.u32 %s8, 1
        %s221 = sand.u32 %s8, 1
        %s222 = smul.addr %s221, 8
        %s223 = scalar_lea.vmem [#allocation1], %s222
        %s224 = sadd.s32 %s19, %s18
        %s225 = sadd.s32 %s224, %s17
        %s226 = sadd.s32 %s225, %s16
        %s227 = smul.addr %s15, 4
        %s228 = sadd.s32 %s226, %s227
        %s229 = smul.addr %s228, 8
        %s230 = scalar_lea.vmem %s1, %s229
        // Predicated region
        $region55: #{custom-call.20} parent=53 // pred_check
          _
        $region56: #{custom-call.20} parent=53 // pred_check_branch
          %232 = sbr.rel (0) target = $region58
        $region57: #{custom-call.20} parent=53 // pred_region
          // Predicated region
          $region59: #{custom-call.20} parent=57 // pred_check
            _
          $region60: #{custom-call.20} parent=57 // pred_check_branch
            %234 = sbr.rel (0) target = $region62
          $region61: #{custom-call.20} parent=57 // pred_region
            // Predicated region
            $region74: #{custom-call.20} parent=61 // pred_check
              _
            $region75: #{custom-call.20} parent=61 // pred_check_branch
              %249 = sbr.rel (0) target = $region77
            $region76: #{custom-call.20} parent=61 // pred_region
              loop: start=0, step=1, limit=1
              $region78: #{custom-call.20} parent=76 // loop_pre_header
                _
              $region79: #{custom-call.20} parent=76 // loop_header
                %s251 = sphi 0, %s255
                %p252 = scmp.ge.s32.totalorder %s251, 1
                %s256 = sphi %s223, %s223
                %s257 = sphi %s230, %s230
              $region80: #{custom-call.20} parent=76 // loop_header_branch
                %254 = sbr.rel (%p252) target = $region84
              $region81: #{custom-call.20} parent=76 // loop_body
                %v258 = vld [vmem:[%s256] sm:$0xff]
                %259 = vst [vmem:[%s257] sm:$0xff] %v258
              $region82: #{custom-call.20} parent=76 // loop_footer
                %s255 = sadd.s32 1, %s251
              $region83: #{custom-call.20} parent=76 // loop_footer_branch
                %250 = sbr.rel target = $region79
              $region84: #{custom-call.20} parent=76 // loop_exit
                _
            $region77: #{custom-call.20} parent=61 // pred_fallthru
              _
            // Predicated region
            $region85: #{custom-call.20} parent=61 // pred_check
              _
            $region86: #{custom-call.20} parent=61 // pred_check_branch
              %261 = sbr.rel target = $region88
            $region87: #{custom-call.20} parent=61 // pred_region
              _
            $region88: #{custom-call.20} parent=61 // pred_fallthru
              _
          $region62: #{custom-call.20} parent=57 // pred_fallthru
            _
          // Predicated region
          $region63: #{custom-call.20} parent=57 // pred_check
            _
          $region64: #{custom-call.20} parent=57 // pred_check_branch
            %236 = sbr.rel target = $region66
          $region65: #{custom-call.20} parent=57 // pred_region
            loop: start=0, step=1, limit=1
            $region67: #{custom-call.20} parent=65 // loop_pre_header
              _
            $region68: #{custom-call.20} parent=65 // loop_header
              %s239 = sphi 0, %s243
              %p240 = scmp.ge.s32.totalorder %s239, 1
              %s244 = sphi %s223, %s223
              %s245 = sphi %s230, %s230
            $region69: #{custom-call.20} parent=65 // loop_header_branch
              %242 = sbr.rel (%p240) target = $region73
            $region70: #{custom-call.20} parent=65 // loop_body
              %v246 = vld [vmem:[%s244] sm:$0xff]
              %247 = vst [vmem:[%s245] sm:$0xff] %v246
            $region71: #{custom-call.20} parent=65 // loop_footer
              %s243 = sadd.s32 1, %s239
            $region72: #{custom-call.20} parent=65 // loop_footer_branch
              %238 = sbr.rel target = $region68
            $region73: #{custom-call.20} parent=65 // loop_exit
              _
          $region66: #{custom-call.20} parent=57 // pred_fallthru
            _
        $region58: #{custom-call.20} parent=53 // pred_fallthru
          _
        %262 = vnop
      $region54: #{custom-call.20} parent=5 // pred_fallthru
        _
      %p263 = scmp.le.s32.totalorder 2, %s3
      // Predicated region
      $region89: #{custom-call.20} parent=5 // pred_check
        %p264 = pneg %p263
      $region90: #{custom-call.20} parent=5 // pred_check_branch
        %266 = sbr.rel (%p264) target = $region92
      $region91: #{custom-call.20} parent=5 // pred_region
        %s267 = ssub.s32 %s3, 2
        %s268 = sand.u32 %s9, 1
        %s269 = sand.u32 %s9, 1
        %s270 = smul.addr %s269, 8
        %s271 = scalar_lea.vmem [#allocation1], %s270
      $region92: #{custom-call.20} parent=5 // pred_fallthru
        _
    $region6: #{custom-call.20} parent=1 // loop_footer
      %s7 = sadd.s32 1, %s3
    $region7: #{custom-call.20} parent=1 // loop_footer_branch
      %2 = sbr.rel target = $region3
    $region8: #{custom-call.20} parent=1 // loop_exit
      _

// kernel: vargp_forward.1
$region0: #{vargp_forward.1}
  #allocation0 [shape = 'u32[]', space=smem, size = 0x4, offset = 0x4, fixed_abs, tag = 'smem constant byte address 0x4 - core index']
  #allocation1 [shape = 'u32[144,128]{1,0:T(1,128)}', space=vmem, size = 0x12000, scoped, tag = 'internal scratch']
  %s0 = inlined_call_operand.vmem [shape: f32[3,16], index: 0, kind: input, shape index: {}]
  %s1 = inlined_call_operand.vmem [shape: f32[16,128], index: 1, kind: input, shape index: {}]
  %s2 = inlined_call_operand.vmem [shape: f32[96,16], index: 2, kind: input, shape index: {}]
  %s3 = inlined_call_operand.vmem [shape: f32[3,32,1], index: 3, kind: input, shape index: {}]
  %s4 = inlined_call_operand.vmem [shape: f32[108,96], index: 4, kind: input, shape index: {}]
  %s5 = inlined_call_operand.vmem [shape: f32[12,1], index: 5, kind: input, shape index: {}]
  %s6 = inlined_call_operand.vmem [shape: f32[12,128], index: 6, kind: output, shape index: {0}]
  %s7 = inlined_call_operand.vmem [shape: f32[12,128], index: 7, kind: output, shape index: {1}]
  %8 = xla_tuple %s6, %s7
  %s9 = sld [smem:[#allocation0]]
  $region42: #{vargp_forward.1} parent=0
    _
  %s11 = ssub.s32 1, %s9
  %s12 = scalar_select 0, %s11, %s9
  // Predicated region
  $region2: #{vargp_forward.1} parent=0 // pred_check
    _
  $region3: #{vargp_forward.1} parent=0 // pred_check_branch
    %14 = sbr.rel (0) target = $region5
  $region4: #{vargp_forward.1} parent=0 // pred_region
    _
  $region5: #{vargp_forward.1} parent=0 // pred_fallthru
    _
  // Predicated region
  $region6: #{vargp_forward.1} parent=0 // pred_check
    _
  $region7: #{vargp_forward.1} parent=0 // pred_check_branch
    %16 = sbr.rel (0) target = $region9
  $region8: #{vargp_forward.1} parent=0 // pred_region
    _
  $region9: #{vargp_forward.1} parent=0 // pred_fallthru
    _
  // Predicated region
  $region10: #{vargp_forward.1} parent=0 // pred_check
    _
  $region11: #{vargp_forward.1} parent=0 // pred_check_branch
    %18 = sbr.rel (0) target = $region13
  $region12: #{vargp_forward.1} parent=0 // pred_region
    _
  $region13: #{vargp_forward.1} parent=0 // pred_fallthru
    _
  // Predicated region
  $region14: #{vargp_forward.1} parent=0 // pred_check
    _
  $region15: #{vargp_forward.1} parent=0 // pred_check_branch
    %20 = sbr.rel (0) target = $region17
  $region16: #{vargp_forward.1} parent=0 // pred_region
    _
  $region17: #{vargp_forward.1} parent=0 // pred_fallthru
    _
  // Predicated region
  $region18: #{vargp_forward.1} parent=0 // pred_check
    _
  $region19: #{vargp_forward.1} parent=0 // pred_check_branch
    %22 = sbr.rel (0) target = $region21
  $region20: #{vargp_forward.1} parent=0 // pred_region
    _
  $region21: #{vargp_forward.1} parent=0 // pred_fallthru
    _
  // Predicated region
  $region22: #{vargp_forward.1} parent=0 // pred_check
    _
  $region23: #{vargp_forward.1} parent=0 // pred_check_branch
    %24 = sbr.rel (0) target = $region25
  $region24: #{vargp_forward.1} parent=0 // pred_region
    _
  $region25: #{vargp_forward.1} parent=0 // pred_fallthru
    _
  %v25 = vld [vmem:[%s1] sm:$0xff]
  %v26 = vld [vmem:[%s1 + $0x8] sm:$0xff]
  %v27 = vmul.f32 %v25, %v25
  %v28 = vmul.f32 %v26, %v26
  %v29 = vld [vmem:[%s0] sm:$0x7]
  %vm30 = vcmask 130048
  %v32 = vsel %vm30, %v29, 0
  %34 = vmatprep.subr.mxu0 0.0
  %35 = vmatpush1.msra.mxu0 %v27
  %36 = vmatprep.subr.mxu0 0.0
  %37 = vmatpush1.msra.mxu0 %v28
  %38 = vmatprep.subr.mxu0 0.0
  %39 = vmatpush1.msra.mxu0 0.0
  %40 = vmatprep.subr.mxu0 0.0
  %41 = vmatpush1.msra.mxu0 0.0
  %42 = vmatprep.subr.mxu0 0.0
  %43 = vmatpush1.msra.mxu0 0.0
  %44 = vmatprep.subr.mxu0 0.0
  %45 = vmatpush1.msra.mxu0 0.0
  %46 = vmatprep.subr.mxu0 0.0
  %47 = vmatpush1.msra.mxu0 0.0
  %48 = vmatprep.subr.mxu0 0.0
  %49 = vmatpush1.msra.mxu0 0.0
  %50 = vmatprep.subr.mxu0 0.0
  %51 = vmatpush1.msra.mxu0 0.0
  %52 = vmatprep.subr.mxu0 0.0
  %53 = vmatpush1.msra.mxu0 0.0
  %54 = vmatprep.subr.mxu0 0.0
  %55 = vmatpush1.msra.mxu0 0.0
  %56 = vmatprep.subr.mxu0 0.0
  %57 = vmatpush1.msra.mxu0 0.0
  %58 = vmatprep.subr.mxu0 0.0
  %59 = vmatpush1.msra.mxu0 0.0
  %60 = vmatprep.subr.mxu0 0.0
  %61 = vmatpush1.msra.mxu0 0.0
  %62 = vmatprep.subr.mxu0 0.0
  %63 = vmatpush1.msra.mxu0 0.0
  %64 = vmatprep.subr.mxu0 0.0
  %65 = vmatpush1.msra.mxu0 0.0
  %66 = vmatprep.subr.mxu0 0.0
  %67 = vmatpush1.msra.mxu0 0.0
  %68 = vmatprep.subr.mxu0 0.0
  %69 = vmatpush1.msra.mxu0 0.0
  %70 = vmatprep.subr.mxu0 0.0
  %71 = vmatpush1.msra.mxu0 0.0
  %72 = vmatprep.subr.mxu0 0.0
  %73 = vmatpush1.msra.mxu0 0.0
  %74 = vmatprep.subr.mxu0 0.0
  %75 = vmatpush1.msra.mxu0 0.0
  %76 = vmatprep.subr.mxu0 0.0
  %77 = vmatpush1.msra.mxu0 0.0
  %78 = vmatprep.subr.mxu0 0.0
  %79 = vmatpush1.msra.mxu0 0.0
  %80 = vmatprep.subr.mxu0 0.0
  %81 = vmatpush1.msra.mxu0 0.0
  %82 = vmatprep.subr.mxu0 0.0
  %83 = vmatpush1.msra.mxu0 0.0
  %84 = vmatprep.subr.mxu0 0.0
  %85 = vmatpush1.msra.mxu0 0.0
  %86 = vmatprep.subr.mxu0 0.0
  %87 = vmatpush1.msra.mxu0 0.0
  %88 = vmatprep.subr.mxu0 0.0
  %89 = vmatpush1.msra.mxu0 0.0
  %90 = vmatprep.subr.mxu0 0.0
  %91 = vmatpush1.msra.mxu0 0.0
  %92 = vmatprep.subr.mxu0 0.0
  %93 = vmatpush1.msra.mxu0 0.0
  %94 = vmatprep.subr.mxu0 0.0
  %95 = vmatpush1.msra.mxu0 0.0
  %96 = vmatprep.subr.mxu0 0.0
  %97 = vmatpush1.msra.mxu0 0.0
  %98 = vmatprep.mubr.f32.mxu0 0.0
  %99 = vmatmul.mubr.f32.gmra.mrb[0].mxu0 %v32
  %v100 = vpop.f32.mrb[0].mxu0
  %v101 = vadd.f32 0.0, %v100
  %v102 = vpop.f32.mrb[0].mxu0
  %103 = vdwg.mxu0
  %v104 = vld [vmem:[%s2] sm:$0xff]
  %v105 = vld [vmem:[%s2 + $0x8] sm:$0xff]
  %v106 = vld [vmem:[%s2 + $0x10] sm:$0xff]
  %v107 = vld [vmem:[%s2 + $0x18] sm:$0xff]
  %v108 = vld [vmem:[%s2 + $0x20] sm:$0xff]
  %v109 = vld [vmem:[%s2 + $0x28] sm:$0xff]
  %v110 = vld [vmem:[%s2 + $0x30] sm:$0xff]
  %v111 = vld [vmem:[%s2 + $0x38] sm:$0xff]
  %v112 = vld [vmem:[%s2 + $0x40] sm:$0xff]
  %v113 = vld [vmem:[%s2 + $0x48] sm:$0xff]
  %v114 = vld [vmem:[%s2 + $0x50] sm:$0xff]
  %v115 = vld [vmem:[%s2 + $0x58] sm:$0xff]
  %v117 = vsel %vm30, %v104, 0
  %v120 = vsel %vm30, %v105, 0
  %v123 = vsel %vm30, %v106, 0
  %v126 = vsel %vm30, %v107, 0
  %v129 = vsel %vm30, %v108, 0
  %v132 = vsel %vm30, %v109, 0
  %v135 = vsel %vm30, %v110, 0
  %v138 = vsel %vm30, %v111, 0
  %v141 = vsel %vm30, %v112, 0
  %v144 = vsel %vm30, %v113, 0
  %v147 = vsel %vm30, %v114, 0
  %v150 = vsel %vm30, %v115, 0
  %152 = vmatprep.subr.mxu0 0.0
  %153 = vmatpush1.msra.mxu0 %v25
  %154 = vmatprep.subr.mxu0 0.0
  %155 = vmatpush1.msra.mxu0 %v26
  %156 = vmatprep.subr.mxu0 0.0
  %157 = vmatpush1.msra.mxu0 0.0
  %158 = vmatprep.subr.mxu0 0.0
  %159 = vmatpush1.msra.mxu0 0.0
  %160 = vmatprep.subr.mxu0 0.0
  %161 = vmatpush1.msra.mxu0 0.0
  %162 = vmatprep.subr.mxu0 0.0
  %163 = vmatpush1.msra.mxu0 0.0
  %164 = vmatprep.subr.mxu0 0.0
  %165 = vmatpush1.msra.mxu0 0.0
  %166 = vmatprep.subr.mxu0 0.0
  %167 = vmatpush1.msra.mxu0 0.0
  %168 = vmatprep.subr.mxu0 0.0
  %169 = vmatpush1.msra.mxu0 0.0
  %170 = vmatprep.subr.mxu0 0.0
  %171 = vmatpush1.msra.mxu0 0.0
  %172 = vmatprep.subr.mxu0 0.0
  %173 = vmatpush1.msra.mxu0 0.0
  %174 = vmatprep.subr.mxu0 0.0
  %175 = vmatpush1.msra.mxu0 0.0
  %176 = vmatprep.subr.mxu0 0.0
  %177 = vmatpush1.msra.mxu0 0.0
  %178 = vmatprep.subr.mxu0 0.0
  %179 = vmatpush1.msra.mxu0 0.0
  %180 = vmatprep.subr.mxu0 0.0
  %181 = vmatpush1.msra.mxu0 0.0
  %182 = vmatprep.subr.mxu0 0.0
  %183 = vmatpush1.msra.mxu0 0.0
  %184 = vmatprep.subr.mxu0 0.0
  %185 = vmatpush1.msra.mxu0 0.0
  %186 = vmatprep.subr.mxu0 0.0
  %187 = vmatpush1.msra.mxu0 0.0
  %188 = vmatprep.subr.mxu0 0.0
  %189 = vmatpush1.msra.mxu0 0.0
  %190 = vmatprep.subr.mxu0 0.0
  %191 = vmatpush1.msra.mxu0 0.0
  %192 = vmatprep.subr.mxu0 0.0
  %193 = vmatpush1.msra.mxu0 0.0
  %194 = vmatprep.subr.mxu0 0.0
  %195 = vmatpush1.msra.mxu0 0.0
  %196 = vmatprep.subr.mxu0 0.0
  %197 = vmatpush1.msra.mxu0 0.0
  %198 = vmatprep.subr.mxu0 0.0
  %199 = vmatpush1.msra.mxu0 0.0
  %200 = vmatprep.subr.mxu0 0.0
  %201 = vmatpush1.msra.mxu0 0.0
  %202 = vmatprep.subr.mxu0 0.0
  %203 = vmatpush1.msra.mxu0 0.0
  %204 = vmatprep.subr.mxu0 0.0
  %205 = vmatpush1.msra.mxu0 0.0
  %206 = vmatprep.subr.mxu0 0.0
  %207 = vmatpush1.msra.mxu0 0.0
  %208 = vmatprep.subr.mxu0 0.0
  %209 = vmatpush1.msra.mxu0 0.0
  %210 = vmatprep.subr.mxu0 0.0
  %211 = vmatpush1.msra.mxu0 0.0
  %212 = vmatprep.subr.mxu0 0.0
  %213 = vmatpush1.msra.mxu0 0.0
  %214 = vmatprep.subr.mxu0 0.0
  %215 = vmatpush1.msra.mxu0 0.0
  %216 = vmatprep.mubr.f32.mxu0 0.0
  %217 = vmatmul.mubr.f32.gmra.mrb[0].mxu0 %v117
  %v218 = vpop.f32.mrb[0].mxu0
  %v219 = vadd.f32 0.0, %v218
  %v220 = vpop.f32.mrb[0].mxu0
  %221 = vmatprep.mubr.f32.mxu0 0.0
  %222 = vmatmul.mubr.f32.gmra.mrb[0].mxu0 %v120
  %v223 = vpop.f32.mrb[0].mxu0
  %v224 = vadd.f32 0.0, %v223
  %v225 = vpop.f32.mrb[0].mxu0
  %226 = vmatprep.mubr.f32.mxu0 0.0
  %227 = vmatmul.mubr.f32.gmra.mrb[0].mxu0 %v123
  %v228 = vpop.f32.mrb[0].mxu0
  %v229 = vadd.f32 0.0, %v228
  %v230 = vpop.f32.mrb[0].mxu0
  %231 = vmatprep.mubr.f32.mxu0 0.0
  %232 = vmatmul.mubr.f32.gmra.mrb[0].mxu0 %v126
  %v233 = vpop.f32.mrb[0].mxu0
  %v234 = vadd.f32 0.0, %v233
  %v235 = vpop.f32.mrb[0].mxu0
  %236 = vmatprep.mubr.f32.mxu0 0.0
  %237 = vmatmul.mubr.f32.gmra.mrb[0].mxu0 %v129
  %v238 = vpop.f32.mrb[0].mxu0
  %v239 = vadd.f32 0.0, %v238
  %v240 = vpop.f32.mrb[0].mxu0
  %241 = vmatprep.mubr.f32.mxu0 0.0
  %242 = vmatmul.mubr.f32.gmra.mrb[0].mxu0 %v132
  %v243 = vpop.f32.mrb[0].mxu0
  %v244 = vadd.f32 0.0, %v243
  %v245 = vpop.f32.mrb[0].mxu0
  %246 = vmatprep.mubr.f32.mxu0 0.0
  %247 = vmatmul.mubr.f32.gmra.mrb[0].mxu0 %v135
  %v248 = vpop.f32.mrb[0].mxu0
  %v249 = vadd.f32 0.0, %v248
  %v250 = vpop.f32.mrb[0].mxu0
  %251 = vmatprep.mubr.f32.mxu0 0.0
  %252 = vmatmul.mubr.f32.gmra.mrb[0].mxu0 %v138
  %v253 = vpop.f32.mrb[0].mxu0
  %v254 = vadd.f32 0.0, %v253
  %v255 = vpop.f32.mrb[0].mxu0
  %256 = vmatprep.mubr.f32.mxu0 0.0
  %257 = vmatmul.mubr.f32.gmra.mrb[0].mxu0 %v141
  %v258 = vpop.f32.mrb[0].mxu0
  %v259 = vadd.f32 0.0, %v258
  %v260 = vpop.f32.mrb[0].mxu0
  %261 = vmatprep.mubr.f32.mxu0 0.0
  %262 = vmatmul.mubr.f32.gmra.mrb[0].mxu0 %v144
  %v263 = vpop.f32.mrb[0].mxu0
  %v264 = vadd.f32 0.0, %v263
  %v265 = vpop.f32.mrb[0].mxu0
  %266 = vmatprep.mubr.f32.mxu0 0.0
  %267 = vmatmul.mubr.f32.gmra.mrb[0].mxu0 %v147
  %v268 = vpop.f32.mrb[0].mxu0
  %v269 = vadd.f32 0.0, %v268
  %v270 = vpop.f32.mrb[0].mxu0
  %271 = vmatprep.mubr.f32.mxu0 0.0
  %272 = vmatmul.mubr.f32.gmra.mrb[0].mxu0 %v150
  %v273 = vpop.f32.mrb[0].mxu0
  %v274 = vadd.f32 0.0, %v273
  %v275 = vpop.f32.mrb[0].mxu0
  %276 = vdwg.mxu0
  %v277 = vld [vmem:[%s3] sm:$0xff]
  %v278 = vld [vmem:[%s3 + $0x8] sm:$0xff]
  %v279 = vld [vmem:[%s3 + $0x10] sm:$0xff]
  %v280 = vld [vmem:[%s3 + $0x18] sm:$0xff]
  %v281 = vld [vmem:[%s3 + $0x20] sm:$0xff]
  %v282 = vld [vmem:[%s3 + $0x28] sm:$0xff]
  %v283 = vld [vmem:[%s3 + $0x30] sm:$0xff]
  %v284 = vld [vmem:[%s3 + $0x38] sm:$0xff]
  %v285 = vld [vmem:[%s3 + $0x40] sm:$0xff]
  %v286 = vld [vmem:[%s3 + $0x48] sm:$0xff]
  %v287 = vld [vmem:[%s3 + $0x50] sm:$0xff]
  %v288 = vld [vmem:[%s3 + $0x58] sm:$0xff]
  %v291 = vunpack.c.l.s4 1966171168
  %v292 = vunpack.c.0.s8 %v291
  %v293 = vlaneseq
  %v294 = vshrl.u32 %v293, 7
  %v295 = vsub.s32 %v292, %v294
  %v296 = vrot.slane %v101, %v295
  %v297 = vcombine.high %v296, %v296
  %v299 = vunpack.c.l.s4 1966171168
  %v300 = vunpack.c.0.s8 %v299
  %v301 = vlaneseq
  %v302 = vshrl.u32 %v301, 7
  %v303 = vsub.s32 %v300, %v302
  %v304 = vrot.slane %v296, %v303
  %v306 = vunpack.c.l.s4 1966171168
  %v307 = vunpack.c.0.s8 %v306
  %v308 = vlaneseq
  %v309 = vshrl.u32 %v308, 7
  %v310 = vsub.s32 %v307, %v309
  %v311 = vrot.slane %v297, %v310
  %v312 = vcombine.high %v304, %v304
  %314 = vset.pattern.permute.xlu0 0
  %315 = vperm.xlu0 %314, %v277
  %v316 = vpop.permute.xlu0 %315
  %319 = vset.pattern.permute.xlu0 0
  %320 = vperm.xlu0 %319, %v278
  %v321 = vpop.permute.xlu0 %320
  %324 = vset.pattern.permute.xlu0 0
  %325 = vperm.xlu0 %324, %v279
  %v326 = vpop.permute.xlu0 %325
  %329 = vset.pattern.permute.xlu0 0
  %330 = vperm.xlu0 %329, %v280
  %v331 = vpop.permute.xlu0 %330
  %334 = vset.pattern.permute.xlu0 0
  %335 = vperm.xlu0 %334, %v281
  %v336 = vpop.permute.xlu0 %335
  %339 = vset.pattern.permute.xlu0 0
  %340 = vperm.xlu0 %339, %v282
  %v341 = vpop.permute.xlu0 %340
  %344 = vset.pattern.permute.xlu0 0
  %345 = vperm.xlu0 %344, %v283
  %v346 = vpop.permute.xlu0 %345
  %349 = vset.pattern.permute.xlu0 0
  %350 = vperm.xlu0 %349, %v284
  %v351 = vpop.permute.xlu0 %350
  %354 = vset.pattern.permute.xlu0 0
  %355 = vperm.xlu0 %354, %v285
  %v356 = vpop.permute.xlu0 %355
  %359 = vset.pattern.permute.xlu0 0
  %360 = vperm.xlu0 %359, %v286
  %v361 = vpop.permute.xlu0 %360
  %364 = vset.pattern.permute.xlu0 0
  %365 = vperm.xlu0 %364, %v287
  %v366 = vpop.permute.xlu0 %365
  %369 = vset.pattern.permute.xlu0 0
  %370 = vperm.xlu0 %369, %v288
  %v371 = vpop.permute.xlu0 %370
  %v373 = vlaneseq
  %v374 = vshrl.u32 %v373, 7
  %v375 = vsub.s32 0, %v374
  %v376 = vrot.slane %v304, %v375
  %v377 = vlaneseq
  %v378 = vshrl.u32 %v377, 7
  %v379 = vsub.s32 0, %v378
  %v380 = vrot.slane %v311, %v379
  %v381 = vlaneseq
  %v382 = vshrl.u32 %v381, 7
  %v383 = vsub.s32 0, %v382
  %v384 = vrot.slane %v312, %v383
  %v388 = vadd.f32 %v316, %v376
  %v389 = vadd.f32 %v321, %v376
  %v390 = vadd.f32 %v326, %v376
  %v391 = vadd.f32 %v331, %v376
  %v392 = vadd.f32 %v336, %v380
  %v393 = vadd.f32 %v341, %v380
  %v394 = vadd.f32 %v346, %v380
  %v395 = vadd.f32 %v351, %v380
  %v396 = vadd.f32 %v356, %v384
  %v397 = vadd.f32 %v361, %v384
  %v398 = vadd.f32 %v366, %v384
  %v399 = vadd.f32 %v371, %v384
  %v400 = vmul.f32 %v219, 2.0
  %v401 = vmul.f32 %v224, 2.0
  %v402 = vmul.f32 %v229, 2.0
  %v403 = vmul.f32 %v234, 2.0
  %v404 = vmul.f32 %v239, 2.0
  %v405 = vmul.f32 %v244, 2.0
  %v406 = vmul.f32 %v249, 2.0
  %v407 = vmul.f32 %v254, 2.0
  %v408 = vmul.f32 %v259, 2.0
  %v409 = vmul.f32 %v264, 2.0
  %v410 = vmul.f32 %v269, 2.0
  %v411 = vmul.f32 %v274, 2.0
  %v412 = vsub.f32 %v388, %v400
  %v413 = vsub.f32 %v389, %v401
  %v414 = vsub.f32 %v390, %v402
  %v415 = vsub.f32 %v391, %v403
  %v416 = vsub.f32 %v392, %v404
  %v417 = vsub.f32 %v393, %v405
  %v418 = vsub.f32 %v394, %v406
  %v419 = vsub.f32 %v395, %v407
  %v420 = vsub.f32 %v396, %v408
  %v421 = vsub.f32 %v397, %v409
  %v422 = vsub.f32 %v398, %v410
  %v423 = vsub.f32 %v399, %v411
  %v424 = vmax.f32 %v412, 0.0
  %v425 = vmax.f32 %v413, 0.0
  %v426 = vmax.f32 %v414, 0.0
  %v427 = vmax.f32 %v415, 0.0
  %v428 = vmax.f32 %v416, 0.0
  %v429 = vmax.f32 %v417, 0.0
  %v430 = vmax.f32 %v418, 0.0
  %v431 = vmax.f32 %v419, 0.0
  %v432 = vmax.f32 %v420, 0.0
  %v433 = vmax.f32 %v421, 0.0
  %v434 = vmax.f32 %v422, 0.0
  %v435 = vmax.f32 %v423, 0.0
  %v436 = vmul.f32 %v424, -0.5
  %v437 = vmul.f32 %v425, -0.5
  %v438 = vmul.f32 %v426, -0.5
  %v439 = vmul.f32 %v427, -0.5
  %v440 = vmul.f32 %v428, -0.5
  %v441 = vmul.f32 %v429, -0.5
  %v442 = vmul.f32 %v430, -0.5
  %v443 = vmul.f32 %v431, -0.5
  %v444 = vmul.f32 %v432, -0.5
  %v445 = vmul.f32 %v433, -0.5
  %v446 = vmul.f32 %v434, -0.5
  %v447 = vmul.f32 %v435, -0.5
  %v448 = vmul.f32 %v436, 1.442695
  %v449 = vpow.pop %v448
  %v450 = vmul.f32 %v437, 1.442695
  %v451 = vpow.pop %v450
  %v452 = vmul.f32 %v438, 1.442695
  %v453 = vpow.pop %v452
  %v454 = vmul.f32 %v439, 1.442695
  %v455 = vpow.pop %v454
  %v456 = vmul.f32 %v440, 1.442695
  %v457 = vpow.pop %v456
  %v458 = vmul.f32 %v441, 1.442695
  %v459 = vpow.pop %v458
  %v460 = vmul.f32 %v442, 1.442695
  %v461 = vpow.pop %v460
  %v462 = vmul.f32 %v443, 1.442695
  %v463 = vpow.pop %v462
  %v464 = vmul.f32 %v444, 1.442695
  %v465 = vpow.pop %v464
  %v466 = vmul.f32 %v445, 1.442695
  %v467 = vpow.pop %v466
  %v468 = vmul.f32 %v446, 1.442695
  %v469 = vpow.pop %v468
  %v470 = vmul.f32 %v447, 1.442695
  %v471 = vpow.pop %v470
  %v472 = vld [vmem:[%s4] sm:$0xff]
  %v473 = vld [vmem:[%s4 + $0x8] sm:$0xff]
  %v474 = vld [vmem:[%s4 + $0x10] sm:$0xff]
  %v475 = vld [vmem:[%s4 + $0x18] sm:$0xff]
  %v476 = vld [vmem:[%s4 + $0x20] sm:$0xff]
  %v477 = vld [vmem:[%s4 + $0x28] sm:$0xff]
  %v478 = vld [vmem:[%s4 + $0x30] sm:$0xff]
  %v479 = vld [vmem:[%s4 + $0x38] sm:$0xff]
  %v480 = vld [vmem:[%s4 + $0x40] sm:$0xff]
  %v481 = vld [vmem:[%s4 + $0x48] sm:$0xff]
  %v482 = vld [vmem:[%s4 + $0x50] sm:$0xff]
  %v483 = vld [vmem:[%s4 + $0x58] sm:$0xff]
  %v484 = vld [vmem:[%s4 + $0x60] sm:$0xff]
  %v485 = vld [vmem:[%s4 + $0x68] sm:$0xf]
  %vm486 = vcmask 785408
  %v488 = vsel %vm486, %v472, 0
  %v491 = vsel %vm486, %v473, 0
  %v494 = vsel %vm486, %v474, 0
  %v497 = vsel %vm486, %v475, 0
  %v500 = vsel %vm486, %v476, 0
  %v503 = vsel %vm486, %v477, 0
  %v506 = vsel %vm486, %v478, 0
  %v509 = vsel %vm486, %v479, 0
  %v512 = vsel %vm486, %v480, 0
  %v515 = vsel %vm486, %v481, 0
  %v518 = vsel %vm486, %v482, 0
  %v521 = vsel %vm486, %v483, 0
  %v524 = vsel %vm486, %v484, 0
  %v527 = vsel %vm486, %v485, 0
  %529 = vmatprep.subr.mxu0 0.0
  %530 = vmatpush1.msra.mxu0 %v449
  %531 = vmatprep.subr.mxu0 0.0
  %532 = vmatpush1.msra.mxu0 %v451
  %533 = vmatprep.subr.mxu0 0.0
  %534 = vmatpush1.msra.mxu0 %v453
  %535 = vmatprep.subr.mxu0 0.0
  %536 = vmatpush1.msra.mxu0 %v455
  %537 = vmatprep.subr.mxu0 0.0
  %538 = vmatpush1.msra.mxu0 %v457
  %539 = vmatprep.subr.mxu0 0.0
  %540 = vmatpush1.msra.mxu0 %v459
  %541 = vmatprep.subr.mxu0 0.0
  %542 = vmatpush1.msra.mxu0 %v461
  %543 = vmatprep.subr.mxu0 0.0
  %544 = vmatpush1.msra.mxu0 %v463
  %545 = vmatprep.subr.mxu0 0.0
  %546 = vmatpush1.msra.mxu0 %v465
  %547 = vmatprep.subr.mxu0 0.0
  %548 = vmatpush1.msra.mxu0 %v467
  %549 = vmatprep.subr.mxu0 0.0
  %550 = vmatpush1.msra.mxu0 %v469
  %551 = vmatprep.subr.mxu0 0.0
  %552 = vmatpush1.msra.mxu0 %v471
  %553 = vmatprep.subr.mxu0 0.0
  %554 = vmatpush1.msra.mxu0 0.0
  %555 = vmatprep.subr.mxu0 0.0
  %556 = vmatpush1.msra.mxu0 0.0
  %557 = vmatprep.subr.mxu0 0.0
  %558 = vmatpush1.msra.mxu0 0.0
  %559 = vmatprep.subr.mxu0 0.0
  %560 = vmatpush1.msra.mxu0 0.0
  %561 = vmatprep.subr.mxu0 0.0
  %562 = vmatpush1.msra.mxu0 0.0
  %563 = vmatprep.subr.mxu0 0.0
  %564 = vmatpush1.msra.mxu0 0.0
  %565 = vmatprep.subr.mxu0 0.0
  %566 = vmatpush1.msra.mxu0 0.0
  %567 = vmatprep.subr.mxu0 0.0
  %568 = vmatpush1.msra.mxu0 0.0
  %569 = vmatprep.subr.mxu0 0.0
  %570 = vmatpush1.msra.mxu0 0.0
  %571 = vmatprep.subr.mxu0 0.0
  %572 = vmatpush1.msra.mxu0 0.0
  %573 = vmatprep.subr.mxu0 0.0
  %574 = vmatpush1.msra.mxu0 0.0
  %575 = vmatprep.subr.mxu0 0.0
  %576 = vmatpush1.msra.mxu0 0.0
  %577 = vmatprep.subr.mxu0 0.0
  %578 = vmatpush1.msra.mxu0 0.0
  %579 = vmatprep.subr.mxu0 0.0
  %580 = vmatpush1.msra.mxu0 0.0
  %581 = vmatprep.subr.mxu0 0.0
  %582 = vmatpush1.msra.mxu0 0.0
  %583 = vmatprep.subr.mxu0 0.0
  %584 = vmatpush1.msra.mxu0 0.0
  %585 = vmatprep.subr.mxu0 0.0
  %586 = vmatpush1.msra.mxu0 0.0
  %587 = vmatprep.subr.mxu0 0.0
  %588 = vmatpush1.msra.mxu0 0.0
  %589 = vmatprep.subr.mxu0 0.0
  %590 = vmatpush1.msra.mxu0 0.0
  %591 = vmatprep.subr.mxu0 0.0
  %592 = vmatpush1.msra.mxu0 0.0
  %593 = vmatprep.mubr.f32.mxu0 0.0
  %594 = vmatmul.mubr.f32.gmra.mrb[0].mxu0 %v488
  %v595 = vpop.f32.mrb[0].mxu0
  %v596 = vadd.f32 0.0, %v595
  %v597 = vpop.f32.mrb[0].mxu0
  %598 = vmatprep.mubr.f32.mxu0 0.0
  %599 = vmatmul.mubr.f32.gmra.mrb[0].mxu0 %v491
  %v600 = vpop.f32.mrb[0].mxu0
  %v601 = vadd.f32 0.0, %v600
  %v602 = vpop.f32.mrb[0].mxu0
  %603 = vmatprep.mubr.f32.mxu0 0.0
  %604 = vmatmul.mubr.f32.gmra.mrb[0].mxu0 %v494
  %v605 = vpop.f32.mrb[0].mxu0
  %v606 = vadd.f32 0.0, %v605
  %v607 = vpop.f32.mrb[0].mxu0
  %608 = vmatprep.mubr.f32.mxu0 0.0
  %609 = vmatmul.mubr.f32.gmra.mrb[0].mxu0 %v497
  %v610 = vpop.f32.mrb[0].mxu0
  %v611 = vadd.f32 0.0, %v610
  %v612 = vpop.f32.mrb[0].mxu0
  %613 = vmatprep.mubr.f32.mxu0 0.0
  %614 = vmatmul.mubr.f32.gmra.mrb[0].mxu0 %v500
  %v615 = vpop.f32.mrb[0].mxu0
  %v616 = vadd.f32 0.0, %v615
  %v617 = vpop.f32.mrb[0].mxu0
  %618 = vmatprep.mubr.f32.mxu0 0.0
  %619 = vmatmul.mubr.f32.gmra.mrb[0].mxu0 %v503
  %v620 = vpop.f32.mrb[0].mxu0
  %v621 = vadd.f32 0.0, %v620
  %v622 = vpop.f32.mrb[0].mxu0
  %623 = vmatprep.mubr.f32.mxu0 0.0
  %624 = vmatmul.mubr.f32.gmra.mrb[0].mxu0 %v506
  %v625 = vpop.f32.mrb[0].mxu0
  %v626 = vadd.f32 0.0, %v625
  %v627 = vpop.f32.mrb[0].mxu0
  %628 = vmatprep.mubr.f32.mxu0 0.0
  %629 = vmatmul.mubr.f32.gmra.mrb[0].mxu0 %v509
  %v630 = vpop.f32.mrb[0].mxu0
  %v631 = vadd.f32 0.0, %v630
  %v632 = vpop.f32.mrb[0].mxu0
  %633 = vmatprep.mubr.f32.mxu0 0.0
  %634 = vmatmul.mubr.f32.gmra.mrb[0].mxu0 %v512
  %v635 = vpop.f32.mrb[0].mxu0
  %v636 = vadd.f32 0.0, %v635
  %v637 = vpop.f32.mrb[0].mxu0
  %638 = vmatprep.mubr.f32.mxu0 0.0
  %639 = vmatmul.mubr.f32.gmra.mrb[0].mxu0 %v515
  %v640 = vpop.f32.mrb[0].mxu0
  %v641 = vadd.f32 0.0, %v640
  %v642 = vpop.f32.mrb[0].mxu0
  %643 = vmatprep.mubr.f32.mxu0 0.0
  %644 = vmatmul.mubr.f32.gmra.mrb[0].mxu0 %v518
  %v645 = vpop.f32.mrb[0].mxu0
  %v646 = vadd.f32 0.0, %v645
  %v647 = vpop.f32.mrb[0].mxu0
  %648 = vmatprep.mubr.f32.mxu0 0.0
  %649 = vmatmul.mubr.f32.gmra.mrb[0].mxu0 %v521
  %v650 = vpop.f32.mrb[0].mxu0
  %v651 = vadd.f32 0.0, %v650
  %v652 = vpop.f32.mrb[0].mxu0
  %653 = vmatprep.mubr.f32.mxu0 0.0
  %654 = vmatmul.mubr.f32.gmra.mrb[0].mxu0 %v524
  %v655 = vpop.f32.mrb[0].mxu0
  %v656 = vadd.f32 0.0, %v655
  %v657 = vpop.f32.mrb[0].mxu0
  %658 = vmatprep.mubr.f32.mxu0 0.0
  %659 = vmatmul.mubr.f32.gmra.mrb[0].mxu0 %v527
  %v660 = vpop.f32.mrb[0].mxu0
  %v661 = vadd.f32 0.0, %v660
  %v662 = vpop.f32.mrb[0].mxu0
  %663 = vdwg.mxu0
  %v664 = vmul.f32 %v449, %v596
  %v665 = vmul.f32 %v451, %v601
  %v666 = vmul.f32 %v453, %v606
  %v667 = vmul.f32 %v455, %v611
  %v668 = vmul.f32 %v457, %v616
  %v669 = vmul.f32 %v459, %v621
  %v670 = vmul.f32 %v461, %v626
  %v671 = vmul.f32 %v463, %v631
  %v672 = vmul.f32 %v465, %v636
  %v673 = vmul.f32 %v467, %v641
  %v674 = vmul.f32 %v469, %v646
  %v675 = vmul.f32 %v471, %v651
  %v676 = vrot.slane %v664, 4
  %v677 = vadd.f32 %v664, %v676
  %v678 = vrot.slane %v677, 2
  %v679 = vadd.f32 %v677, %v678
  %v680 = vrot.slane %v679, 1
  %v681 = vadd.f32 %v679, %v680
  %v682 = vrot.slane %v665, 4
  %v683 = vadd.f32 %v665, %v682
  %v684 = vrot.slane %v683, 2
  %v685 = vadd.f32 %v683, %v684
  %v686 = vrot.slane %v685, 1
  %v687 = vadd.f32 %v685, %v686
  %v688 = vrot.slane %v666, 4
  %v689 = vadd.f32 %v666, %v688
  %v690 = vrot.slane %v689, 2
  %v691 = vadd.f32 %v689, %v690
  %v692 = vrot.slane %v691, 1
  %v693 = vadd.f32 %v691, %v692
  %v694 = vrot.slane %v667, 4
  %v695 = vadd.f32 %v667, %v694
  %v696 = vrot.slane %v695, 2
  %v697 = vadd.f32 %v695, %v696
  %v698 = vrot.slane %v697, 1
  %v699 = vadd.f32 %v697, %v698
  %v700 = vrot.slane %v668, 4
  %v701 = vadd.f32 %v668, %v700
  %v702 = vrot.slane %v701, 2
  %v703 = vadd.f32 %v701, %v702
  %v704 = vrot.slane %v703, 1
  %v705 = vadd.f32 %v703, %v704
  %v706 = vrot.slane %v669, 4
  %v707 = vadd.f32 %v669, %v706
  %v708 = vrot.slane %v707, 2
  %v709 = vadd.f32 %v707, %v708
  %v710 = vrot.slane %v709, 1
  %v711 = vadd.f32 %v709, %v710
  %v712 = vrot.slane %v670, 4
  %v713 = vadd.f32 %v670, %v712
  %v714 = vrot.slane %v713, 2
  %v715 = vadd.f32 %v713, %v714
  %v716 = vrot.slane %v715, 1
  %v717 = vadd.f32 %v715, %v716
  %v718 = vrot.slane %v671, 4
  %v719 = vadd.f32 %v671, %v718
  %v720 = vrot.slane %v719, 2
  %v721 = vadd.f32 %v719, %v720
  %v722 = vrot.slane %v721, 1
  %v723 = vadd.f32 %v721, %v722
  %v724 = vrot.slane %v672, 4
  %v725 = vadd.f32 %v672, %v724
  %v726 = vrot.slane %v725, 2
  %v727 = vadd.f32 %v725, %v726
  %v728 = vrot.slane %v727, 1
  %v729 = vadd.f32 %v727, %v728
  %v730 = vrot.slane %v673, 4
  %v731 = vadd.f32 %v673, %v730
  %v732 = vrot.slane %v731, 2
  %v733 = vadd.f32 %v731, %v732
  %v734 = vrot.slane %v733, 1
  %v735 = vadd.f32 %v733, %v734
  %v736 = vrot.slane %v674, 4
  %v737 = vadd.f32 %v674, %v736
  %v738 = vrot.slane %v737, 2
  %v739 = vadd.f32 %v737, %v738
  %v740 = vrot.slane %v739, 1
  %v741 = vadd.f32 %v739, %v740
  %v742 = vrot.slane %v675, 4
  %v743 = vadd.f32 %v675, %v742
  %v744 = vrot.slane %v743, 2
  %v745 = vadd.f32 %v743, %v744
  %v746 = vrot.slane %v745, 1
  %v747 = vadd.f32 %v745, %v746
  %v748 = vld [vmem:[%s5] sm:$0xff]
  %v749 = vld [vmem:[%s5 + $0x8] sm:$0xf]
  %751 = vset.pattern.permute.xlu0 0
  %752 = vperm.xlu0 %751, %v748
  %v753 = vpop.permute.xlu0 %752
  %756 = vset.pattern.permute.xlu0 0
  %757 = vperm.xlu0 %756, %v749
  %v758 = vpop.permute.xlu0 %757
  %vm772 = vcmask 1041409
  %v773 = vsel %vm772, %v687, %v681
  %vm774 = vcmask 1042434
  %v775 = vsel %vm774, %v693, %v773
  %vm776 = vcmask 1043459
  %v777 = vsel %vm776, %v699, %v775
  %vm778 = vcmask 1044484
  %v779 = vsel %vm778, %v705, %v777
  %vm780 = vcmask 1045509
  %v781 = vsel %vm780, %v711, %v779
  %vm782 = vcmask 1046534
  %v783 = vsel %vm782, %v717, %v781
  %vm784 = vcmask 1047559
  %v785 = vsel %vm784, %v723, %v783
  %v786 = vsel %vm772, %v735, %v729
  %v787 = vsel %vm774, %v741, %v786
  %v788 = vsel %vm776, %v747, %v787
  %v791 = vadd.f32 %v753, %v785
  %v792 = vadd.f32 %v758, %v788
  %v793 = vmax.f32 %v791, 1e-06
  %v794 = vmax.f32 %v792, 1e-06
  %795 = vst [vmem:[%s6] sm:$0xff] %v656
  %796 = vst [vmem:[%s6 + $0x8] sm:$0xf] %v661
  %797 = vst [vmem:[%s7] sm:$0xff] %v793
  %798 = vst [vmem:[%s7 + $0x8] sm:$0xf] %v794
  // Predicated region
  $region26: #{vargp_forward.1} parent=0 // pred_check
    _
  $region27: #{vargp_forward.1} parent=0 // pred_check_branch
    %800 = sbr.rel (0) target = $region29
  $region28: #{vargp_forward.1} parent=0 // pred_region
    _
  $region29: #{vargp_forward.1} parent=0 // pred_fallthru
    _
  // Predicated region
  $region30: #{vargp_forward.1} parent=0 // pred_check
    _
  $region31: #{vargp_forward.1} parent=0 // pred_check_branch
    %802 = sbr.rel (0) target = $region33
  $region32: #{vargp_forward.1} parent=0 // pred_region
    _
  $region33: #{vargp_forward.1} parent=0 // pred_fallthru
    _
  // Predicated region
  $region34: #{vargp_forward.1} parent=0 // pred_check
    _
  $region35: #{vargp_forward.1} parent=0 // pred_check_branch
    %804 = sbr.rel (0) target = $region37
  $region36: #{vargp_forward.1} parent=0 // pred_region
    _
  $region37: #{vargp_forward.1} parent=0 // pred_fallthru
    _
  // Predicated region
  $region38: #{vargp_forward.1} parent=0 // pred_check
    _
  $region39: #{vargp_forward.1} parent=0 // pred_check_branch
    %806 = sbr.rel (0) target = $region41
  $region40: #{vargp_forward.1} parent=0 // pred_region
    _
  $region41: #{vargp_forward.1} parent=0 // pred_fallthru
    _

</llo_original>
